<compile_context>
chip_gen: v5e
topology: v5e:2x2
jax: 0.10.0
libtpu: 0.0.40
codegen_flags: <defaults>
</compile_context>

<pallas_src>
import functools

import jax
import jax.numpy as jnp
from jax.experimental import pallas as pl
from jax.experimental.pallas import tpu as pltpu

BN_EPS = 1e-5


def _response_unit_kernel(x_ref, w1_ref, w2_ref, w3_ref, bias_ref, o_ref, *, h0, h1):
    # Cast x to bf16 in-kernel (VPU cast hides under DMA slack) — no wrapper pass.
    x = x_ref[...].astype(jnp.bfloat16)

    # ---- fc + ReLU (bf16 MXU inputs, f32 accumulate + f32 epilogue) ----
    h = jnp.dot(x, w1_ref[...], preferred_element_type=jnp.float32)
    h = jnp.maximum(h + bias_ref[:, :h0], 0.0)

    # ---- classifier block: Linear (eval-mode BatchNorm folded into w2/bias) -> ReLU ----
    # Dropout(p=0.5) is identity in eval mode.
    h = jnp.dot(h.astype(jnp.bfloat16), w2_ref[...], preferred_element_type=jnp.float32)
    h = jnp.maximum(h + bias_ref[:, h0:h0 + h1], 0.0)

    # ---- fc2 + sigmoid (sigmoid's exp runs on the EUP slot) ----
    logits = jnp.dot(h.astype(jnp.bfloat16), w3_ref[...],
                     preferred_element_type=jnp.float32)
    o_ref[...] = jax.nn.sigmoid(logits + bias_ref[:, h0 + h1:]).astype(o_ref.dtype)


def response_unit_forward(x, params, *, batch_tile=512, out_dtype=jnp.float32):
    """x: [B, drug_dim] (f32 or bf16, passed as-is). params: see fold_bn_and_cast.

    out_dtype=jnp.bfloat16 halves output HBM writeback if downstream tolerates it.
    On v7x pick batch_tile so cdiv(B, batch_tile) >= 2 (ideally even) to use both TCs.
    """
    B, drug_dim = x.shape
    h0 = params["w1"].shape[1]
    h1 = params["w2"].shape[1]
    out_dim = params["w3"].shape[1]

    # Sublane-aligned batch tile (multiple of 8). No wrapper padding: the ragged
    # last block's out-of-range rows are unspecified on read and masked on write.
    b_ceil8 = ((B + 7) // 8) * 8
    tile = max(8, (min(batch_tile, b_ceil8) // 8) * 8)
    num_tiles = pl.cdiv(B, tile)

    def row_spec(feat):
        # Full feature extent on the lane axis, tiled over batch.
        return pl.BlockSpec((tile, feat), lambda i: (i, 0))

    def const_spec(shape):
        # Grid-invariant parameter: constant index_map => DMA'd once and reused.
        return pl.BlockSpec(shape, lambda i: tuple(0 for _ in shape))

    # Advisory cost hint so XLA can schedule/overlap around the custom call.
    flops = 2 * B * (drug_dim * h0 + h0 * h1 + h1 * out_dim)
    transcendentals = B * out_dim  # sigmoid
    bytes_accessed = (
        x.size * x.dtype.itemsize
        + sum(params[k].size * params[k].dtype.itemsize
              for k in ("w1", "w2", "w3", "bias"))
        + B * out_dim * jnp.dtype(out_dtype).itemsize
    )

    kernel = functools.partial(_response_unit_kernel, h0=h0, h1=h1)

    return pl.pallas_call(
        kernel,
        out_shape=jax.ShapeDtypeStruct((B, out_dim), out_dtype),
        grid_spec=pltpu.PrefetchScalarGridSpec(
            num_scalar_prefetch=0,
            grid=(num_tiles,),
            in_specs=[
                row_spec(drug_dim),                 # x (native dtype, cast in-kernel)
                const_spec(params["w1"].shape),     # w1 (bf16)
                const_spec(params["w2"].shape),     # w2 (bf16, BN folded)
                const_spec(params["w3"].shape),     # w3 (bf16)
                const_spec(params["bias"].shape),   # coalesced [b1 | b2_folded | b3] (f32)
            ],
            out_specs=row_spec(out_dim),
        ),
        compiler_params=pltpu.CompilerParams(
            dimension_semantics=("parallel",)),     # batch tiles shard across v7x's 2 TCs
        cost_estimate=pl.CostEstimate(
            flops=flops,
            transcendentals=transcendentals,
            bytes_accessed=bytes_accessed),
    )(x, params["w1"], params["w2"], params["w3"], params["bias"])


def init_params(key, drug_dim, fc_hid_dim, output_dim):
    """Deterministic synthetic raw (f32, un-folded) parameters matching the PyTorch module."""
    ks = jax.random.split(key, 6)
    h0, h1 = fc_hid_dim

    def kaiming_uniform(k, fan_in, shape):
        bound = jnp.sqrt(1.0 / fan_in)
        return jax.random.uniform(k, shape, jnp.float32, -bound, bound)

    def xavier_uniform(k, fan_in, fan_out):
        bound = jnp.sqrt(6.0 / (fan_in + fan_out))
        return jax.random.uniform(k, (fan_in, fan_out), jnp.float32, -bound, bound)

    return {
        # fc: Linear(drug_dim, h0) — weight stored as [in, out]
        "w1": kaiming_uniform(ks[0], drug_dim, (drug_dim, h0)),
        "b1": kaiming_uniform(ks[1], drug_dim, (1, h0)),
        # classifier[0][0]: Linear(h0, h1), xavier_uniform per __init__
        "w2": xavier_uniform(ks[2], h0, h1),
        "b2": kaiming_uniform(ks[3], h0, (1, h1)),
        # BatchNorm1d(h1) — eval-mode running stats / affine params
        "gamma": jnp.ones((1, h1), jnp.float32),
        "beta": jnp.zeros((1, h1), jnp.float32),
        "mean": jnp.zeros((1, h1), jnp.float32),
        "var": jnp.ones((1, h1), jnp.float32),
        # fc2: Linear(h1, output_dim)
        "w3": kaiming_uniform(ks[4], h1, (h1, output_dim)),
        "b3": kaiming_uniform(ks[5], h1, (1, output_dim)),
    }


def fold_bn_and_cast(raw):
    """Fold eval-mode BatchNorm1d into the second Linear, cast weights to bf16,
    and coalesce the three biases into one (1, h0+h1+out_dim) f32 array.

    y = ((x @ w2 + b2) - mean) * gamma / sqrt(var+eps) + beta
      =  x @ (w2 * scale) + ((b2 - mean) * scale + beta),  scale = gamma*rsqrt(var+eps)
    """
    scale = raw["gamma"] * jax.lax.rsqrt(raw["var"] + BN_EPS)        # (1, h1)
    w2_f = raw["w2"] * scale                                          # per-output-column
    b2_f = (raw["b2"] - raw["mean"]) * scale + raw["beta"]
    bias = jnp.concatenate([raw["b1"], b2_f, raw["b3"]], axis=1).astype(jnp.float32)
    return {
        "w1": raw["w1"].astype(jnp.bfloat16),
        "w2": w2_f.astype(jnp.bfloat16),
        "w3": raw["w3"].astype(jnp.bfloat16),
        "bias": bias,
    }


def reference_forward(x, p):
    """Pure-JAX f32 reference with the ORIGINAL (un-folded) module semantics (eval mode)."""
    h = jnp.maximum(x @ p["w1"] + p["b1"], 0.0)
    h = h @ p["w2"] + p["b2"]
    h = (h - p["mean"]) * jax.lax.rsqrt(p["var"] + BN_EPS) * p["gamma"] + p["beta"]
    h = jnp.maximum(h, 0.0)
    # Dropout identity in eval mode.
    return jax.nn.sigmoid(h @ p["w3"] + p["b3"])


if __name__ == "__main__":
    # Small-but-realistic shapes consistent with the module. batch=500 is deliberately
    # NOT a multiple of the tile (exercises the masked ragged-last-block path) and
    # batch_tile=256 yields 2 balanced tiles so v7x can use both TensorCores.
    batch, drug_dim, fc_hid_dim, output_dim = 500, 256, [128, 128], 256

    key = jax.random.PRNGKey(0)
    kx, kp = jax.random.split(key)
    x = jax.random.normal(kx, (batch, drug_dim), jnp.float32)

    raw_params = init_params(kp, drug_dim, fc_hid_dim, output_dim)
    params = fold_bn_and_cast(raw_params)

    out = response_unit_forward(x, params, batch_tile=256)  # f32 output for tight check
    out = jax.block_until_ready(out)

    ref = reference_forward(x, raw_params)
    assert out.shape == (batch, output_dim)
    max_err = float(jnp.max(jnp.abs(out - ref)))
    # bf16 weights/activations on the MXU vs f32 reference + BN folding => small fp drift.
    assert max_err < 2e-2, f"max abs err {max_err}"

    print("KERNEL_OK")
</pallas_src>

<mosaic_0001>
module attributes {stable_mosaic.version = 11 : i64} {
  func.func @_response_unit_kernel(%arg0: i32, %arg1: memref<256x256xf32, #tpu.memory_space<vmem>>, %arg2: memref<256x128xbf16, #tpu.memory_space<vmem>>, %arg3: memref<128x128xbf16, #tpu.memory_space<vmem>>, %arg4: memref<128x256xbf16, #tpu.memory_space<vmem>>, %arg5: memref<1x512xf32, #tpu.memory_space<vmem>>, %arg6: memref<256x256xf32, #tpu.memory_space<vmem>>) attributes {dimension_semantics = [#tpu.dimension_semantics<parallel>], iteration_bounds = array<i64: 2>, scalar_prefetch = 0 : i64, scratch_operands = 0 : i64, tpu.core_type = #tpu.core_type<tc>, window_params = [{transform_indices = @transform_0, window_bounds = array<i64: 256, 256>}, {pipeline_mode = #tpu.pipeline_mode<synchronous>, transform_indices = @transform_1, window_bounds = array<i64: 256, 128>}, {pipeline_mode = #tpu.pipeline_mode<synchronous>, transform_indices = @transform_2, window_bounds = array<i64: 128, 128>}, {pipeline_mode = #tpu.pipeline_mode<synchronous>, transform_indices = @transform_3, window_bounds = array<i64: 128, 256>}, {pipeline_mode = #tpu.pipeline_mode<synchronous>, transform_indices = @transform_4, window_bounds = array<i64: 1, 512>}, {transform_indices = @transform_5, window_bounds = array<i64: 256, 256>}]} {
    %c0 = arith.constant 0 : index
    %c0_0 = arith.constant 0 : index
    %0 = vector.load %arg1[%c0, %c0_0] : memref<256x256xf32, #tpu.memory_space<vmem>>, vector<256x256xf32>
    %1 = arith.truncf %0 : vector<256x256xf32> to vector<256x256xbf16>
    %c0_1 = arith.constant 0 : index
    %c0_2 = arith.constant 0 : index
    %2 = vector.load %arg2[%c0_1, %c0_2] : memref<256x128xbf16, #tpu.memory_space<vmem>>, vector<256x128xbf16>
    %cst = arith.constant dense<0.000000e+00> : vector<256x128xf32>
    %3 = tpu.matmul %1, %2, %cst {dimension_numbers = #tpu.dot_dimension_numbers<[1], [0], [0], [1], [0, 0, 1, 1], [], []>} : vector<256x256xbf16>, vector<256x128xbf16>, vector<256x128xf32> -> vector<256x128xf32>
    %c0_3 = arith.constant 0 : index
    %c0_4 = arith.constant 0 : index
    %4 = vector.load %arg5[%c0_3, %c0_4] : memref<1x512xf32, #tpu.memory_space<vmem>>, vector<1x128xf32>
    %5 = vector.broadcast %4 : vector<1x128xf32> to vector<256x128xf32>
    %6 = arith.addf %3, %5 : vector<256x128xf32>
    %cst_5 = arith.constant 0.000000e+00 : f32
    %7 = vector.broadcast %cst_5 : f32 to vector<256x128xf32>
    %8 = arith.maximumf %6, %7 : vector<256x128xf32>
    %9 = arith.truncf %8 : vector<256x128xf32> to vector<256x128xbf16>
    %c0_6 = arith.constant 0 : index
    %c0_7 = arith.constant 0 : index
    %10 = vector.load %arg3[%c0_6, %c0_7] : memref<128x128xbf16, #tpu.memory_space<vmem>>, vector<128x128xbf16>
    %cst_8 = arith.constant dense<0.000000e+00> : vector<256x128xf32>
    %11 = tpu.matmul %9, %10, %cst_8 {dimension_numbers = #tpu.dot_dimension_numbers<[1], [0], [0], [1], [0, 0, 1, 1], [], []>} : vector<256x128xbf16>, vector<128x128xbf16>, vector<256x128xf32> -> vector<256x128xf32>
    %c0_9 = arith.constant 0 : index
    %c128 = arith.constant 128 : index
    %12 = vector.load %arg5[%c0_9, %c128] : memref<1x512xf32, #tpu.memory_space<vmem>>, vector<1x128xf32>
    %13 = vector.broadcast %12 : vector<1x128xf32> to vector<256x128xf32>
    %14 = arith.addf %11, %13 : vector<256x128xf32>
    %cst_10 = arith.constant 0.000000e+00 : f32
    %15 = vector.broadcast %cst_10 : f32 to vector<256x128xf32>
    %16 = arith.maximumf %14, %15 : vector<256x128xf32>
    %17 = arith.truncf %16 : vector<256x128xf32> to vector<256x128xbf16>
    %c0_11 = arith.constant 0 : index
    %c0_12 = arith.constant 0 : index
    %18 = vector.load %arg4[%c0_11, %c0_12] : memref<128x256xbf16, #tpu.memory_space<vmem>>, vector<128x256xbf16>
    %cst_13 = arith.constant dense<0.000000e+00> : vector<256x256xf32>
    %19 = tpu.matmul %17, %18, %cst_13 {dimension_numbers = #tpu.dot_dimension_numbers<[1], [0], [0], [1], [0, 0, 1, 1], [], []>} : vector<256x128xbf16>, vector<128x256xbf16>, vector<256x256xf32> -> vector<256x256xf32>
    %c0_14 = arith.constant 0 : index
    %c256 = arith.constant 256 : index
    %20 = vector.load %arg5[%c0_14, %c256] : memref<1x512xf32, #tpu.memory_space<vmem>>, vector<1x256xf32>
    %21 = vector.broadcast %20 : vector<1x256xf32> to vector<256x256xf32>
    %22 = arith.addf %19, %21 : vector<256x256xf32>
    %23 = arith.negf %22 : vector<256x256xf32>
    %24 = math.exp %23 : vector<256x256xf32>
    %cst_15 = arith.constant 1.000000e+00 : f32
    %25 = vector.broadcast %cst_15 : f32 to vector<256x256xf32>
    %26 = arith.addf %25, %24 : vector<256x256xf32>
    %27 = arith.divf %25, %26 : vector<256x256xf32>
    %c0_16 = arith.constant 0 : index
    %c0_17 = arith.constant 0 : index
    %28 = vector.load %arg6[%c0_16, %c0_17] : memref<256x256xf32, #tpu.memory_space<vmem>>, vector<256x256xf32>
    tpu.vector_store %arg6[%c0_16, %c0_17], %27 {strides = array<i32>} : memref<256x256xf32, #tpu.memory_space<vmem>>, vector<256x256xf32>,
    return
  }
  func.func @transform_0(%arg0: i32) -> (i32, i32) {
    %c0_i32 = arith.constant 0 : i32
    %c0_i32_0 = arith.constant 0 : i32
    return %arg0, %c0_i32 : i32, i32
  }
  func.func @transform_1(%arg0: i32) -> (i32, i32) {
    %c0_i32 = arith.constant 0 : i32
    %c0_i32_0 = arith.constant 0 : i32
    %c0_i32_1 = arith.constant 0 : i32
    return %c0_i32, %c0_i32_0 : i32, i32
  }
  func.func @transform_2(%arg0: i32) -> (i32, i32) {
    %c0_i32 = arith.constant 0 : i32
    %c0_i32_0 = arith.constant 0 : i32
    %c0_i32_1 = arith.constant 0 : i32
    return %c0_i32, %c0_i32_0 : i32, i32
  }
  func.func @transform_3(%arg0: i32) -> (i32, i32) {
    %c0_i32 = arith.constant 0 : i32
    %c0_i32_0 = arith.constant 0 : i32
    %c0_i32_1 = arith.constant 0 : i32
    return %c0_i32, %c0_i32_0 : i32, i32
  }
  func.func @transform_4(%arg0: i32) -> (i32, i32) {
    %c0_i32 = arith.constant 0 : i32
    %c0_i32_0 = arith.constant 0 : i32
    %c0_i32_1 = arith.constant 0 : i32
    return %c0_i32, %c0_i32_0 : i32, i32
  }
  func.func @transform_5(%arg0: i32) -> (i32, i32) {
    %c0_i32 = arith.constant 0 : i32
    %c0_i32_0 = arith.constant 0 : i32
    return %arg0, %c0_i32 : i32, i32
  }
}

</mosaic_0001>

<llo_original>
// kernel: tpu_custom_call.1
$region0: #{tpu_custom_call.1}
  #allocation0 [shape = 'u32[]', space=smem, size = 0x4, offset = 0x4, fixed_abs, tag = 'smem constant byte address 0x4 - core index']
  #allocation1 [shape = 'u32[72,128]{1,0:T(1,128)}', space=vmem, size = 0x9000, scoped, tag = 'internal scratch']
  %s0 = inlined_call_operand.hbm [shape: f32[500,256], index: 0, kind: input, shape index: {}]
  %s1 = inlined_call_operand.hbm [shape: bf16[256,128], index: 1, kind: input, shape index: {}]
  %s2 = inlined_call_operand.hbm [shape: bf16[128,128], index: 2, kind: input, shape index: {}]
  %s3 = inlined_call_operand.hbm [shape: bf16[128,256], index: 3, kind: input, shape index: {}]
  %s4 = inlined_call_operand.hbm [shape: f32[1,512], index: 4, kind: input, shape index: {}]
  %s5 = inlined_call_operand.hbm [shape: f32[500,256], index: 5, kind: output, shape index: {}]
  %s6 = sld [smem:[#allocation0]]
  $region73: #{tpu_custom_call.1} parent=0
    _
  %s8 = ssub.s32 1, %s6
  %s9 = scalar_select 0, %s8, %s6
  $region1: #{tpu_custom_call.1} parent=0
    #allocation2 [shape = 'u8[524288]{0}', space=vmem, size = 0x80000, scoped, tag = 'input window, operand 0']
    #allocation3 [shape = 's32[2]{0}', space=sflag, size = 0x8, scoped, tag = 'scoped memory for tpu_custom_call.1']
    #allocation4 [shape = 's32[2]{0}', space=sflag, size = 0x8, scoped, tag = 'scoped memory for tpu_custom_call.1']
    #allocation5 [shape = 'u8[65536]{0}', space=vmem, size = 0x10000, scoped, tag = 'input window, operand 1, single buffered']
    #allocation6 [shape = 's32[1]{0}', space=sflag, size = 0x4, scoped, tag = 'scoped memory for tpu_custom_call.1']
    #allocation7 [shape = 'u8[32768]{0}', space=vmem, size = 0x8000, scoped, tag = 'input window, operand 2, single buffered']
    #allocation8 [shape = 'u8[65536]{0}', space=vmem, size = 0x10000, scoped, tag = 'input window, operand 3, single buffered']
    #allocation9 [shape = 's32[1]{0}', space=sflag, size = 0x4, scoped, tag = 'scoped memory for tpu_custom_call.1']
    #allocation10 [shape = 'u8[2048]{0}', space=vmem, size = 0x800, scoped, tag = 'input window, operand 4, single buffered']
    #allocation11 [shape = 'u8[524288]{0}', space=vmem, size = 0x80000, scoped, tag = 'output window, operand 0']
    %10 = vsyncpa [#allocation3], 0
    %s11 = scalar_lea.sflag [#allocation3], 1
    %12 = vsyncpa %s11, 0
    %13 = vsyncpa [#allocation6], 0
    %14 = vsyncpa [#allocation9], 0
    %15 = vsyncpa [#allocation4], 0
    %s16 = scalar_lea.sflag [#allocation4], 1
    %17 = vsyncpa %s16, 0
    loop: start=0, step=1, limit=4
    $region2: #{tpu_custom_call.1} parent=1 // loop_pre_header
      _
    $region3: #{tpu_custom_call.1} parent=1 // loop_header
      %s19 = sphi 0, %s23
      %p20 = scmp.ge.s32.totalorder %s19, 4
      %s29 = sphi 0, %s31
      %s32 = sphi 0, %s29
      %s33 = sphi 0, %s32
      %s49 = sphi 0, %s33
      %s53 = sphi 0, %s53
      %s55 = sphi 0, %s53
      %s56 = sphi 0, %s55
      %s70 = sphi 0, %s56
      %s74 = sphi 0, %s74
      %s76 = sphi 0, %s74
      %s77 = sphi 0, %s76
      %s91 = sphi 0, %s77
      %s95 = sphi 0, %s95
      %s97 = sphi 0, %s95
      %s98 = sphi 0, %s97
      %s112 = sphi 0, %s98
      %s116 = sphi 0, %s116
      %s118 = sphi 0, %s116
      %s119 = sphi 0, %s118
      %s133 = sphi 0, %s119
      %s139 = sphi 0, %s141
      %s142 = sphi 0, %s139
      %s143 = sphi 0, %s142
      %s159 = sphi 0, %s143
    $region4: #{tpu_custom_call.1} parent=1 // loop_header_branch
      %22 = sbr.rel (%p20) target = $region8
    $region5: #{tpu_custom_call.1} parent=1 // loop_body
      %s24 = ssub.s32 %s19, 1
      %s25 = ssub.s32 %s19, 2
      %s26 = sadd.s32 %s19, 1
      %s27 = ssub.s32 %s19, %s26
      %p28 = scmp.eq.s32.totalorder %s27, 0
      %s30 = sadd.s32 %s29, 1
      %s31 = scalar_select %p28, %s29, %s30
      %p34 = pneg %p28
      %p35 = scmp.eq.s32.totalorder %s19, 1
      %p36 = por %p34, %p35
      %p37 = scmp.ne.s32.totalorder %s29, %s32
      %p38 = scmp.eq.s32.totalorder %s19, 0
      %p39 = por %p37, %p38
      %p40 = scmp.ne.s32.totalorder %s29, %s32
      %p41 = scmp.eq.s32.totalorder %s24, 1
      %p42 = por %p40, %p41
      %p43 = scmp.ne.s32.totalorder %s32, %s33
      %p44 = scmp.eq.s32.totalorder %s24, 0
      %p45 = por %p43, %p44
      %p46 = scmp.ne.s32.totalorder %s32, %s33
      %p47 = scmp.eq.s32.totalorder %s25, 1
      %p48 = por %p46, %p47
      %p50 = scmp.ne.s32.totalorder %s33, %s49
      %p51 = scmp.eq.s32.totalorder %s25, 0
      %p52 = por %p50, %p51
      %s54 = sadd.s32 %s53, 1
      %p57 = scmp.eq.s32.totalorder %s19, 1
      %p58 = scmp.ne.s32.totalorder %s53, %s55
      %p59 = scmp.eq.s32.totalorder %s19, 0
      %p60 = por %p58, %p59
      %p61 = scmp.ne.s32.totalorder %s53, %s55
      %p62 = scmp.eq.s32.totalorder %s24, 1
      %p63 = por %p61, %p62
      %p64 = scmp.ne.s32.totalorder %s55, %s56
      %p65 = scmp.eq.s32.totalorder %s24, 0
      %p66 = por %p64, %p65
      %p67 = scmp.ne.s32.totalorder %s55, %s56
      %p68 = scmp.eq.s32.totalorder %s25, 1
      %p69 = por %p67, %p68
      %p71 = scmp.ne.s32.totalorder %s56, %s70
      %p72 = scmp.eq.s32.totalorder %s25, 0
      %p73 = por %p71, %p72
      %s75 = sadd.s32 %s74, 1
      %p78 = scmp.eq.s32.totalorder %s19, 1
      %p79 = scmp.ne.s32.totalorder %s74, %s76
      %p80 = scmp.eq.s32.totalorder %s19, 0
      %p81 = por %p79, %p80
      %p82 = scmp.ne.s32.totalorder %s74, %s76
      %p83 = scmp.eq.s32.totalorder %s24, 1
      %p84 = por %p82, %p83
      %p85 = scmp.ne.s32.totalorder %s76, %s77
      %p86 = scmp.eq.s32.totalorder %s24, 0
      %p87 = por %p85, %p86
      %p88 = scmp.ne.s32.totalorder %s76, %s77
      %p89 = scmp.eq.s32.totalorder %s25, 1
      %p90 = por %p88, %p89
      %p92 = scmp.ne.s32.totalorder %s77, %s91
      %p93 = scmp.eq.s32.totalorder %s25, 0
      %p94 = por %p92, %p93
      %s96 = sadd.s32 %s95, 1
      %p99 = scmp.eq.s32.totalorder %s19, 1
      %p100 = scmp.ne.s32.totalorder %s95, %s97
      %p101 = scmp.eq.s32.totalorder %s19, 0
      %p102 = por %p100, %p101
      %p103 = scmp.ne.s32.totalorder %s95, %s97
      %p104 = scmp.eq.s32.totalorder %s24, 1
      %p105 = por %p103, %p104
      %p106 = scmp.ne.s32.totalorder %s97, %s98
      %p107 = scmp.eq.s32.totalorder %s24, 0
      %p108 = por %p106, %p107
      %p109 = scmp.ne.s32.totalorder %s97, %s98
      %p110 = scmp.eq.s32.totalorder %s25, 1
      %p111 = por %p109, %p110
      %p113 = scmp.ne.s32.totalorder %s98, %s112
      %p114 = scmp.eq.s32.totalorder %s25, 0
      %p115 = por %p113, %p114
      %s117 = sadd.s32 %s116, 1
      %p120 = scmp.eq.s32.totalorder %s19, 1
      %p121 = scmp.ne.s32.totalorder %s116, %s118
      %p122 = scmp.eq.s32.totalorder %s19, 0
      %p123 = por %p121, %p122
      %p124 = scmp.ne.s32.totalorder %s116, %s118
      %p125 = scmp.eq.s32.totalorder %s24, 1
      %p126 = por %p124, %p125
      %p127 = scmp.ne.s32.totalorder %s118, %s119
      %p128 = scmp.eq.s32.totalorder %s24, 0
      %p129 = por %p127, %p128
      %p130 = scmp.ne.s32.totalorder %s118, %s119
      %p131 = scmp.eq.s32.totalorder %s25, 1
      %p132 = por %p130, %p131
      %p134 = scmp.ne.s32.totalorder %s119, %s133
      %p135 = scmp.eq.s32.totalorder %s25, 0
      %p136 = por %p134, %p135
      %s137 = ssub.s32 %s19, %s26
      %p138 = scmp.eq.s32.totalorder %s137, 0
      %s140 = sadd.s32 %s139, 1
      %s141 = scalar_select %p138, %s139, %s140
      %p144 = pneg %p138
      %p145 = scmp.eq.s32.totalorder %s19, 1
      %p146 = por %p144, %p145
      %p147 = scmp.ne.s32.totalorder %s139, %s142
      %p148 = scmp.eq.s32.totalorder %s19, 0
      %p149 = por %p147, %p148
      %p150 = scmp.ne.s32.totalorder %s139, %s142
      %p151 = scmp.eq.s32.totalorder %s24, 1
      %p152 = por %p150, %p151
      %p153 = scmp.ne.s32.totalorder %s142, %s143
      %p154 = scmp.eq.s32.totalorder %s24, 0
      %p155 = por %p153, %p154
      %p156 = scmp.ne.s32.totalorder %s142, %s143
      %p157 = scmp.eq.s32.totalorder %s25, 1
      %p158 = por %p156, %p157
      %p160 = scmp.ne.s32.totalorder %s143, %s159
      %p161 = scmp.eq.s32.totalorder %s25, 0
      %p162 = por %p160, %p161
      %p163 = scmp.le.s32.totalorder 1, %s19
      %p164 = scmp.lt.s32.totalorder %s19, 3
      %p165 = pnand %p163, %p164
      %p166 = pneg %p165
      // Predicated region
      $region9: #{tpu_custom_call.1} parent=5 // pred_check
        _
      $region10: #{tpu_custom_call.1} parent=5 // pred_check_branch
        %168 = sbr.rel (%p165) target = $region12
      $region11: #{tpu_custom_call.1} parent=5 // pred_region
        %s169 = ssub.s32 %s19, 1
        // Predicated region
        $region13: #{tpu_custom_call.1} parent=11 // pred_check
          %p170 = pneg %p66
        $region14: #{tpu_custom_call.1} parent=11 // pred_check_branch
          %172 = sbr.rel (%p170) target = $region16
        $region15: #{tpu_custom_call.1} parent=11 // pred_region
          %174 = vsyncadd [#allocation6], 0
          %s175 = sshll.u32 %s1, 4
          %s176 = int_to_ptr.hbm [resolvable:$true] %s175
          %s177 = sshll.u32 [#allocation5], 4
          %s178 = int_to_ptr.vmem [resolvable:$true] %s177
          %183 = dma.hbm_to_vmem [thread:$0]  %s176, 2048, %s178, [#allocation6], 64, 64, 4
        $region16: #{tpu_custom_call.1} parent=11 // pred_fallthru
          _
        // Predicated region
        $region17: #{tpu_custom_call.1} parent=11 // pred_check
          %p184 = pneg %p87
        $region18: #{tpu_custom_call.1} parent=11 // pred_check_branch
          %186 = sbr.rel (%p184) target = $region20
        $region19: #{tpu_custom_call.1} parent=11 // pred_region
          %188 = vsyncadd [#allocation6], 0
          %s189 = sshll.u32 %s2, 4
          %s190 = int_to_ptr.hbm [resolvable:$true] %s189
          %s191 = sshll.u32 [#allocation7], 4
          %s192 = int_to_ptr.vmem [resolvable:$true] %s191
          %197 = dma.hbm_to_vmem [thread:$0]  %s190, 1024, %s192, [#allocation6], 64, 64, 4
        $region20: #{tpu_custom_call.1} parent=11 // pred_fallthru
          _
        // Predicated region
        $region21: #{tpu_custom_call.1} parent=11 // pred_check
          %p198 = pneg %p108
        $region22: #{tpu_custom_call.1} parent=11 // pred_check_branch
          %200 = sbr.rel (%p198) target = $region24
        $region23: #{tpu_custom_call.1} parent=11 // pred_region
          %202 = vsyncadd [#allocation9], 0
          %s203 = sshll.u32 %s3, 4
          %s204 = int_to_ptr.hbm [resolvable:$true] %s203
          %s205 = sshll.u32 [#allocation8], 4
          %s206 = int_to_ptr.vmem [resolvable:$true] %s205
          %211 = dma.hbm_to_vmem [thread:$0]  %s204, 2048, %s206, [#allocation9], 128, 128, 8
        $region24: #{tpu_custom_call.1} parent=11 // pred_fallthru
          _
        // Predicated region
        $region25: #{tpu_custom_call.1} parent=11 // pred_check
          %p212 = pneg %p129
        $region26: #{tpu_custom_call.1} parent=11 // pred_check_branch
          %214 = sbr.rel (%p212) target = $region28
        $region27: #{tpu_custom_call.1} parent=11 // pred_region
          %216 = vsyncadd [#allocation9], 0
          %s218 = sshll.u32 %s4, 4
          %s219 = int_to_ptr.hbm [resolvable:$true] %s218
          %s220 = sshll.u32 [#allocation10], 4
          %s221 = int_to_ptr.vmem [resolvable:$true] %s220
          %223 = dma.hbm_to_vmem [thread:$0]  %s219, 64, %s221, [#allocation9]
        $region28: #{tpu_custom_call.1} parent=11 // pred_fallthru
          _
      $region12: #{tpu_custom_call.1} parent=5 // pred_fallthru
        _
      %p224 = scmp.lt.s32.totalorder %s19, 2
      // Predicated region
      $region29: #{tpu_custom_call.1} parent=5 // pred_check
        %p225 = pneg %p224
      $region30: #{tpu_custom_call.1} parent=5 // pred_check_branch
        %227 = sbr.rel (%p225) target = $region32
      $region31: #{tpu_custom_call.1} parent=5 // pred_region
        // Predicated region
        $region33: #{tpu_custom_call.1} parent=31 // pred_check
          %p228 = pneg %p39
        $region34: #{tpu_custom_call.1} parent=31 // pred_check_branch
          %230 = sbr.rel (%p228) target = $region36
        $region35: #{tpu_custom_call.1} parent=31 // pred_region
          %s231 = sand.u32 %s29, 1
          %s232 = scalar_lea.sflag [#allocation3], %s231
          %s233 = sand.u32 %s29, 1
          %s234 = smul.addr %s233, 512
          %s235 = scalar_lea.vmem [#allocation2], %s234
          %s236 = smul.u32 32, %s19
          %s237 = ssub.s32 63, %s236
          %p238 = scmp.lt.s32.totalorder %s237, 32
          %s239 = scalar_select %p238, %s237, 32
          %s240 = smul.u32 8, %s239
          %s241 = smul.u32 %s240, 2
          %s242 = ssub.s32 512, %s241
          %s243 = sshll.u32 %s242, 4
          %244 = vsyncadd %s232, %s243
          %p245 = scmp.ne.s32.totalorder 0, %s241
          %s246 = smul.addr %s236, 2
          %s247 = smul.addr %s246, 8
          %s248 = scalar_lea.hbm %s0, %s247
          %s249 = smul.u32 16, %s239
          %s250 = sshll.u32 %s248, 4
          %s251 = int_to_ptr.hbm [resolvable:$true] %s250
          %s252 = sshll.u32 %s235, 4
          %s253 = int_to_ptr.vmem [resolvable:$true] %s252
          %s254 = sshll.u32 %s249, 4
          %258 = dma.hbm_to_vmem [thread:$0]  (%p245), %s251, %s254, %s253, %s232, 256, 256, 16
        $region36: #{tpu_custom_call.1} parent=31 // pred_fallthru
          _
      $region32: #{tpu_custom_call.1} parent=5 // pred_fallthru
        _
      %p259 = scmp.le.s32.totalorder 1, %s19
      %p260 = scmp.lt.s32.totalorder %s19, 3
      %p261 = pnand %p259, %p260
      %p262 = pneg %p261
      // Predicated region
      $region37: #{tpu_custom_call.1} parent=5 // pred_check
        _
      $region38: #{tpu_custom_call.1} parent=5 // pred_check_branch
        %264 = sbr.rel (%p261) target = $region40
      $region39: #{tpu_custom_call.1} parent=5 // pred_region
        %s265 = ssub.s32 %s19, 1
        %s266 = sand.u32 %s32, 1
        %s267 = scalar_lea.sflag [#allocation3], %s266
        %s268 = sand.u32 %s32, 1
        %s269 = smul.addr %s268, 512
        %s270 = scalar_lea.vmem [#allocation2], %s269
        // Predicated region
        $region41: #{tpu_custom_call.1} parent=39 // pred_check
          %p271 = pneg %p45
        $region42: #{tpu_custom_call.1} parent=39 // pred_check_branch
          %273 = sbr.rel (%p271) target = $region44
        $region43: #{tpu_custom_call.1} parent=39 // pred_region
          %275 = dma.done %s267, 8192
        $region44: #{tpu_custom_call.1} parent=39 // pred_fallthru
          _
        // Predicated region
        $region45: #{tpu_custom_call.1} parent=39 // pred_check
          %p276 = pneg %p66
        $region46: #{tpu_custom_call.1} parent=39 // pred_check_branch
          %278 = sbr.rel (%p276) target = $region48
        $region47: #{tpu_custom_call.1} parent=39 // pred_region
          %280 = dma.done [#allocation6], 2048
        $region48: #{tpu_custom_call.1} parent=39 // pred_fallthru
          _
        // Predicated region
        $region49: #{tpu_custom_call.1} parent=39 // pred_check
          %p281 = pneg %p87
        $region50: #{tpu_custom_call.1} parent=39 // pred_check_branch
          %283 = sbr.rel (%p281) target = $region52
        $region51: #{tpu_custom_call.1} parent=39 // pred_region
          %285 = dma.done [#allocation6], 1024
        $region52: #{tpu_custom_call.1} parent=39 // pred_fallthru
          _
        // Predicated region
        $region53: #{tpu_custom_call.1} parent=39 // pred_check
          %p286 = pneg %p108
        $region54: #{tpu_custom_call.1} parent=39 // pred_check_branch
          %288 = sbr.rel (%p286) target = $region56
        $region55: #{tpu_custom_call.1} parent=39 // pred_region
          %290 = dma.done [#allocation9], 2048
        $region56: #{tpu_custom_call.1} parent=39 // pred_fallthru
          _
        // Predicated region
        $region57: #{tpu_custom_call.1} parent=39 // pred_check
          %p291 = pneg %p129
        $region58: #{tpu_custom_call.1} parent=39 // pred_check_branch
          %293 = sbr.rel (%p291) target = $region60
        $region59: #{tpu_custom_call.1} parent=39 // pred_region
          %295 = dma.done [#allocation9], 64
        $region60: #{tpu_custom_call.1} parent=39 // pred_fallthru
          _
        %s296 = sand.u32 %s32, 1
        %s297 = scalar_lea.sflag [#allocation3], %s296
        %s298 = sand.u32 %s32, 1
        %s299 = smul.addr %s298, 512
        %s300 = scalar_lea.vmem [#allocation2], %s299
        %p301 = pneg %p45
        %p302 = pneg %p42
        %p303 = pneg %p66
        %p304 = pneg %p63
        %p305 = pneg %p87
        %p306 = pneg %p84
        %p307 = pneg %p108
        %p308 = pneg %p105
        %p309 = pneg %p129
        %p310 = pneg %p126
        %p311 = pneg %p155
        %p312 = pneg %p152
        %s313 = sand.u32 %s142, 1
        %s314 = scalar_lea.sflag [#allocation4], %s313
        %s315 = sand.u32 %s142, 1
        %s316 = smul.addr %s315, 512
        %s317 = scalar_lea.vmem [#allocation11], %s316
        %s318 = smul.u32 32, %s24
        %s319 = ssub.s32 63, %s318
        %p320 = scmp.lt.s32.totalorder %s319, 32
        %s321 = scalar_select %p320, %s319, 32
        %s322 = smul.u32 8, %s321
        %s323 = smul.u32 %s322, 2
        %s324 = smul.u32 32, %s24
        %s325 = ssub.s32 63, %s324
        %p326 = scmp.lt.s32.totalorder %s325, 32
        %s327 = scalar_select %p326, %s325, 32
        %s328 = smul.u32 8, %s327
        %s329 = smul.u32 %s328, 2
        %v330 = vld [vmem:[%s270] sm:$0xff]
        %v331 = vld [vmem:[%s270 + $0x8] sm:$0xff]
        %v332 = vld [vmem:[%s270 + $0x10] sm:$0xff]
        %v333 = vld [vmem:[%s270 + $0x18] sm:$0xff]
        %v334 = vld [vmem:[%s270 + $0x20] sm:$0xff]
        %v335 = vld [vmem:[%s270 + $0x28] sm:$0xff]
        %v336 = vld [vmem:[%s270 + $0x30] sm:$0xff]
        %v337 = vld [vmem:[%s270 + $0x38] sm:$0xff]
        %v338 = vld [vmem:[%s270 + $0x40] sm:$0xff]
        %v339 = vld [vmem:[%s270 + $0x48] sm:$0xff]
        %v340 = vld [vmem:[%s270 + $0x50] sm:$0xff]
        %v341 = vld [vmem:[%s270 + $0x58] sm:$0xff]
        %v342 = vld [vmem:[%s270 + $0x60] sm:$0xff]
        %v343 = vld [vmem:[%s270 + $0x68] sm:$0xff]
        %v344 = vld [vmem:[%s270 + $0x70] sm:$0xff]
        %v345 = vld [vmem:[%s270 + $0x78] sm:$0xff]
        %v346 = vld [vmem:[%s270 + $0x80] sm:$0xff]
        %v347 = vld [vmem:[%s270 + $0x88] sm:$0xff]
        %v348 = vld [vmem:[%s270 + $0x90] sm:$0xff]
        %v349 = vld [vmem:[%s270 + $0x98] sm:$0xff]
        %v350 = vld [vmem:[%s270 + $0xa0] sm:$0xff]
        %v351 = vld [vmem:[%s270 + $0xa8] sm:$0xff]
        %v352 = vld [vmem:[%s270 + $0xb0] sm:$0xff]
        %v353 = vld [vmem:[%s270 + $0xb8] sm:$0xff]
        %v354 = vld [vmem:[%s270 + $0xc0] sm:$0xff]
        %v355 = vld [vmem:[%s270 + $0xc8] sm:$0xff]
        %v356 = vld [vmem:[%s270 + $0xd0] sm:$0xff]
        %v357 = vld [vmem:[%s270 + $0xd8] sm:$0xff]
        %v358 = vld [vmem:[%s270 + $0xe0] sm:$0xff]
        %v359 = vld [vmem:[%s270 + $0xe8] sm:$0xff]
        %v360 = vld [vmem:[%s270 + $0xf0] sm:$0xff]
        %v361 = vld [vmem:[%s270 + $0xf8] sm:$0xff]
        %v362 = vld [vmem:[%s270 + $0x100] sm:$0xff]
        %v363 = vld [vmem:[%s270 + $0x108] sm:$0xff]
        %v364 = vld [vmem:[%s270 + $0x110] sm:$0xff]
        %v365 = vld [vmem:[%s270 + $0x118] sm:$0xff]
        %v366 = vld [vmem:[%s270 + $0x120] sm:$0xff]
        %v367 = vld [vmem:[%s270 + $0x128] sm:$0xff]
        %v368 = vld [vmem:[%s270 + $0x130] sm:$0xff]
        %v369 = vld [vmem:[%s270 + $0x138] sm:$0xff]
        %v370 = vld [vmem:[%s270 + $0x140] sm:$0xff]
        %v371 = vld [vmem:[%s270 + $0x148] sm:$0xff]
        %v372 = vld [vmem:[%s270 + $0x150] sm:$0xff]
        %v373 = vld [vmem:[%s270 + $0x158] sm:$0xff]
        %v374 = vld [vmem:[%s270 + $0x160] sm:$0xff]
        %v375 = vld [vmem:[%s270 + $0x168] sm:$0xff]
        %v376 = vld [vmem:[%s270 + $0x170] sm:$0xff]
        %v377 = vld [vmem:[%s270 + $0x178] sm:$0xff]
        %v378 = vld [vmem:[%s270 + $0x180] sm:$0xff]
        %v379 = vld [vmem:[%s270 + $0x188] sm:$0xff]
        %v380 = vld [vmem:[%s270 + $0x190] sm:$0xff]
        %v381 = vld [vmem:[%s270 + $0x198] sm:$0xff]
        %v382 = vld [vmem:[%s270 + $0x1a0] sm:$0xff]
        %v383 = vld [vmem:[%s270 + $0x1a8] sm:$0xff]
        %v384 = vld [vmem:[%s270 + $0x1b0] sm:$0xff]
        %v385 = vld [vmem:[%s270 + $0x1b8] sm:$0xff]
        %v386 = vld [vmem:[%s270 + $0x1c0] sm:$0xff]
        %v387 = vld [vmem:[%s270 + $0x1c8] sm:$0xff]
        %v388 = vld [vmem:[%s270 + $0x1d0] sm:$0xff]
        %v389 = vld [vmem:[%s270 + $0x1d8] sm:$0xff]
        %v390 = vld [vmem:[%s270 + $0x1e0] sm:$0xff]
        %v391 = vld [vmem:[%s270 + $0x1e8] sm:$0xff]
        %v392 = vld [vmem:[%s270 + $0x1f0] sm:$0xff]
        %v393 = vld [vmem:[%s270 + $0x1f8] sm:$0xff]
        %v394 = vpack.c.bf16 %v332, %v330
        %v395 = vpack.c.bf16 %v333, %v331
        %v396 = vpack.c.bf16 %v336, %v334
        %v397 = vpack.c.bf16 %v337, %v335
        %v398 = vpack.c.bf16 %v340, %v338
        %v399 = vpack.c.bf16 %v341, %v339
        %v400 = vpack.c.bf16 %v344, %v342
        %v401 = vpack.c.bf16 %v345, %v343
        %v402 = vpack.c.bf16 %v348, %v346
        %v403 = vpack.c.bf16 %v349, %v347
        %v404 = vpack.c.bf16 %v352, %v350
        %v405 = vpack.c.bf16 %v353, %v351
        %v406 = vpack.c.bf16 %v356, %v354
        %v407 = vpack.c.bf16 %v357, %v355
        %v408 = vpack.c.bf16 %v360, %v358
        %v409 = vpack.c.bf16 %v361, %v359
        %v410 = vpack.c.bf16 %v364, %v362
        %v411 = vpack.c.bf16 %v365, %v363
        %v412 = vpack.c.bf16 %v368, %v366
        %v413 = vpack.c.bf16 %v369, %v367
        %v414 = vpack.c.bf16 %v372, %v370
        %v415 = vpack.c.bf16 %v373, %v371
        %v416 = vpack.c.bf16 %v376, %v374
        %v417 = vpack.c.bf16 %v377, %v375
        %v418 = vpack.c.bf16 %v380, %v378
        %v419 = vpack.c.bf16 %v381, %v379
        %v420 = vpack.c.bf16 %v384, %v382
        %v421 = vpack.c.bf16 %v385, %v383
        %v422 = vpack.c.bf16 %v388, %v386
        %v423 = vpack.c.bf16 %v389, %v387
        %v424 = vpack.c.bf16 %v392, %v390
        %v425 = vpack.c.bf16 %v393, %v391
        %v426 = vld [vmem:[#allocation5] sm:$0xf]
        %v427 = vld [vmem:[#allocation5 + $0x4] sm:$0xf]
        %v428 = vld [vmem:[#allocation5 + $0x8] sm:$0xf]
        %v429 = vld [vmem:[#allocation5 + $0xc] sm:$0xf]
        %v430 = vld [vmem:[#allocation5 + $0x10] sm:$0xf]
        %v431 = vld [vmem:[#allocation5 + $0x14] sm:$0xf]
        %v432 = vld [vmem:[#allocation5 + $0x18] sm:$0xf]
        %v433 = vld [vmem:[#allocation5 + $0x1c] sm:$0xf]
        %v434 = vld [vmem:[#allocation5 + $0x20] sm:$0xf]
        %v435 = vld [vmem:[#allocation5 + $0x24] sm:$0xf]
        %v436 = vld [vmem:[#allocation5 + $0x28] sm:$0xf]
        %v437 = vld [vmem:[#allocation5 + $0x2c] sm:$0xf]
        %v438 = vld [vmem:[#allocation5 + $0x30] sm:$0xf]
        %v439 = vld [vmem:[#allocation5 + $0x34] sm:$0xf]
        %v440 = vld [vmem:[#allocation5 + $0x38] sm:$0xf]
        %v441 = vld [vmem:[#allocation5 + $0x3c] sm:$0xf]
        %v442 = vld [vmem:[#allocation5 + $0x40] sm:$0xf]
        %v443 = vld [vmem:[#allocation5 + $0x44] sm:$0xf]
        %v444 = vld [vmem:[#allocation5 + $0x48] sm:$0xf]
        %v445 = vld [vmem:[#allocation5 + $0x4c] sm:$0xf]
        %v446 = vld [vmem:[#allocation5 + $0x50] sm:$0xf]
        %v447 = vld [vmem:[#allocation5 + $0x54] sm:$0xf]
        %v448 = vld [vmem:[#allocation5 + $0x58] sm:$0xf]
        %v449 = vld [vmem:[#allocation5 + $0x5c] sm:$0xf]
        %v450 = vld [vmem:[#allocation5 + $0x60] sm:$0xf]
        %v451 = vld [vmem:[#allocation5 + $0x64] sm:$0xf]
        %v452 = vld [vmem:[#allocation5 + $0x68] sm:$0xf]
        %v453 = vld [vmem:[#allocation5 + $0x6c] sm:$0xf]
        %v454 = vld [vmem:[#allocation5 + $0x70] sm:$0xf]
        %v455 = vld [vmem:[#allocation5 + $0x74] sm:$0xf]
        %v456 = vld [vmem:[#allocation5 + $0x78] sm:$0xf]
        %v457 = vld [vmem:[#allocation5 + $0x7c] sm:$0xf]
        %v458 = vld [vmem:[#allocation10] sm:$0x1]
        %v460 = vperm.slane %v458, 0
        %v494 = vunpack.c.l.b16 %v426
        %v495 = vunpack.c.l.b16 %v427
        %v496 = vunpack.c.l.b16 %v428
        %v497 = vunpack.c.l.b16 %v429
        %v498 = vunpack.c.l.b16 %v430
        %v499 = vunpack.c.l.b16 %v431
        %v500 = vunpack.c.l.b16 %v432
        %v501 = vunpack.c.l.b16 %v433
        %v502 = vunpack.c.l.b16 %v434
        %v503 = vunpack.c.l.b16 %v435
        %v504 = vunpack.c.l.b16 %v436
        %v505 = vunpack.c.l.b16 %v437
        %v506 = vunpack.c.l.b16 %v438
        %v507 = vunpack.c.l.b16 %v439
        %v508 = vunpack.c.l.b16 %v440
        %v509 = vunpack.c.l.b16 %v441
        %v510 = vunpack.c.l.b16 %v442
        %v511 = vunpack.c.l.b16 %v443
        %v512 = vunpack.c.l.b16 %v444
        %v513 = vunpack.c.l.b16 %v445
        %v514 = vunpack.c.l.b16 %v446
        %v515 = vunpack.c.l.b16 %v447
        %v516 = vunpack.c.l.b16 %v448
        %v517 = vunpack.c.l.b16 %v449
        %v518 = vunpack.c.l.b16 %v450
        %v519 = vunpack.c.l.b16 %v451
        %v520 = vunpack.c.l.b16 %v452
        %v521 = vunpack.c.l.b16 %v453
        %v522 = vunpack.c.l.b16 %v454
        %v523 = vunpack.c.l.b16 %v455
        %v524 = vunpack.c.l.b16 %v456
        %v525 = vunpack.c.l.b16 %v457
        %v526 = vpack.c.b16 %v495, %v494
        %v527 = vpack.c.b16 %v497, %v496
        %v528 = vpack.c.b16 %v499, %v498
        %v529 = vpack.c.b16 %v501, %v500
        %v530 = vpack.c.b16 %v503, %v502
        %v531 = vpack.c.b16 %v505, %v504
        %v532 = vpack.c.b16 %v507, %v506
        %v533 = vpack.c.b16 %v509, %v508
        %v534 = vpack.c.b16 %v511, %v510
        %v535 = vpack.c.b16 %v513, %v512
        %v536 = vpack.c.b16 %v515, %v514
        %v537 = vpack.c.b16 %v517, %v516
        %v538 = vpack.c.b16 %v519, %v518
        %v539 = vpack.c.b16 %v521, %v520
        %v540 = vpack.c.b16 %v523, %v522
        %v541 = vpack.c.b16 %v525, %v524
        %558 = vmatpush.bf16.msra.mxu0 %v533
        %559 = vmatpush.bf16.msra.mxu0 %v532
        %560 = vmatpush.bf16.msra.mxu0 %v531
        %561 = vmatpush.bf16.msra.mxu0 %v530
        %562 = vmatpush.bf16.msra.mxu0 %v529
        %563 = vmatpush.bf16.msra.mxu0 %v528
        %564 = vmatpush.bf16.msra.mxu0 %v527
        %565 = vmatpush.bf16.msra.mxu0 %v526
        %566 = vmatmul.bf16.gmra.mxu0 %v394
        %v567 = vpop.f32.mrf.mxu0
        %v568 = vadd.f32 %v460, %v567
        %v569 = vpop.f32.mrf.mxu0
        %v570 = vadd.f32 %v460, %v569
        %571 = vmatmul.bf16.gmra.mxu0 %v396
        %v572 = vpop.f32.mrf.mxu0
        %v573 = vadd.f32 %v460, %v572
        %v574 = vpop.f32.mrf.mxu0
        %v575 = vadd.f32 %v460, %v574
        %576 = vmatmul.bf16.gmra.mxu0 %v398
        %v577 = vpop.f32.mrf.mxu0
        %v578 = vadd.f32 %v460, %v577
        %v579 = vpop.f32.mrf.mxu0
        %v580 = vadd.f32 %v460, %v579
        %581 = vmatmul.bf16.gmra.mxu0 %v400
        %v582 = vpop.f32.mrf.mxu0
        %v583 = vadd.f32 %v460, %v582
        %v584 = vpop.f32.mrf.mxu0
        %v585 = vadd.f32 %v460, %v584
        %586 = vmatmul.bf16.gmra.mxu0 %v402
        %v587 = vpop.f32.mrf.mxu0
        %v588 = vadd.f32 %v460, %v587
        %v589 = vpop.f32.mrf.mxu0
        %v590 = vadd.f32 %v460, %v589
        %591 = vmatmul.bf16.gmra.mxu0 %v404
        %v592 = vpop.f32.mrf.mxu0
        %v593 = vadd.f32 %v460, %v592
        %v594 = vpop.f32.mrf.mxu0
        %v595 = vadd.f32 %v460, %v594
        %596 = vmatmul.bf16.gmra.mxu0 %v406
        %v597 = vpop.f32.mrf.mxu0
        %v598 = vadd.f32 %v460, %v597
        %v599 = vpop.f32.mrf.mxu0
        %v600 = vadd.f32 %v460, %v599
        %601 = vmatmul.bf16.gmra.mxu0 %v408
        %v602 = vpop.f32.mrf.mxu0
        %v603 = vadd.f32 %v460, %v602
        %v604 = vpop.f32.mrf.mxu0
        %v605 = vadd.f32 %v460, %v604
        %606 = vmatmul.bf16.gmra.mxu0 %v410
        %v607 = vpop.f32.mrf.mxu0
        %v608 = vadd.f32 %v460, %v607
        %v609 = vpop.f32.mrf.mxu0
        %v610 = vadd.f32 %v460, %v609
        %611 = vmatmul.bf16.gmra.mxu0 %v412
        %v612 = vpop.f32.mrf.mxu0
        %v613 = vadd.f32 %v460, %v612
        %v614 = vpop.f32.mrf.mxu0
        %v615 = vadd.f32 %v460, %v614
        %616 = vmatmul.bf16.gmra.mxu0 %v414
        %v617 = vpop.f32.mrf.mxu0
        %v618 = vadd.f32 %v460, %v617
        %v619 = vpop.f32.mrf.mxu0
        %v620 = vadd.f32 %v460, %v619
        %621 = vmatmul.bf16.gmra.mxu0 %v416
        %v622 = vpop.f32.mrf.mxu0
        %v623 = vadd.f32 %v460, %v622
        %v624 = vpop.f32.mrf.mxu0
        %v625 = vadd.f32 %v460, %v624
        %626 = vmatmul.bf16.gmra.mxu0 %v418
        %v627 = vpop.f32.mrf.mxu0
        %v628 = vadd.f32 %v460, %v627
        %v629 = vpop.f32.mrf.mxu0
        %v630 = vadd.f32 %v460, %v629
        %631 = vmatmul.bf16.gmra.mxu0 %v420
        %v632 = vpop.f32.mrf.mxu0
        %v633 = vadd.f32 %v460, %v632
        %v634 = vpop.f32.mrf.mxu0
        %v635 = vadd.f32 %v460, %v634
        %636 = vmatmul.bf16.gmra.mxu0 %v422
        %v637 = vpop.f32.mrf.mxu0
        %v638 = vadd.f32 %v460, %v637
        %v639 = vpop.f32.mrf.mxu0
        %v640 = vadd.f32 %v460, %v639
        %641 = vmatmul.bf16.gmra.mxu0 %v424
        %v642 = vpop.f32.mrf.mxu0
        %v643 = vadd.f32 %v460, %v642
        %v644 = vpop.f32.mrf.mxu0
        %v645 = vadd.f32 %v460, %v644
        %646 = vdwg.mxu0
        %647 = vmatpush.bf16.msra.mxu0 %v541
        %648 = vmatpush.bf16.msra.mxu0 %v540
        %649 = vmatpush.bf16.msra.mxu0 %v539
        %650 = vmatpush.bf16.msra.mxu0 %v538
        %651 = vmatpush.bf16.msra.mxu0 %v537
        %652 = vmatpush.bf16.msra.mxu0 %v536
        %653 = vmatpush.bf16.msra.mxu0 %v535
        %654 = vmatpush.bf16.msra.mxu0 %v534
        %655 = vmatmul.bf16.gmra.mxu0 %v395
        %v656 = vpop.f32.mrf.mxu0
        %v657 = vadd.f32 %v568, %v656
        %v658 = vpop.f32.mrf.mxu0
        %v659 = vadd.f32 %v570, %v658
        %660 = vmatmul.bf16.gmra.mxu0 %v397
        %v661 = vpop.f32.mrf.mxu0
        %v662 = vadd.f32 %v573, %v661
        %v663 = vpop.f32.mrf.mxu0
        %v664 = vadd.f32 %v575, %v663
        %665 = vmatmul.bf16.gmra.mxu0 %v399
        %v666 = vpop.f32.mrf.mxu0
        %v667 = vadd.f32 %v578, %v666
        %v668 = vpop.f32.mrf.mxu0
        %v669 = vadd.f32 %v580, %v668
        %670 = vmatmul.bf16.gmra.mxu0 %v401
        %v671 = vpop.f32.mrf.mxu0
        %v672 = vadd.f32 %v583, %v671
        %v673 = vpop.f32.mrf.mxu0
        %v674 = vadd.f32 %v585, %v673
        %675 = vmatmul.bf16.gmra.mxu0 %v403
        %v676 = vpop.f32.mrf.mxu0
        %v677 = vadd.f32 %v588, %v676
        %v678 = vpop.f32.mrf.mxu0
        %v679 = vadd.f32 %v590, %v678
        %680 = vmatmul.bf16.gmra.mxu0 %v405
        %v681 = vpop.f32.mrf.mxu0
        %v682 = vadd.f32 %v593, %v681
        %v683 = vpop.f32.mrf.mxu0
        %v684 = vadd.f32 %v595, %v683
        %685 = vmatmul.bf16.gmra.mxu0 %v407
        %v686 = vpop.f32.mrf.mxu0
        %v687 = vadd.f32 %v598, %v686
        %v688 = vpop.f32.mrf.mxu0
        %v689 = vadd.f32 %v600, %v688
        %690 = vmatmul.bf16.gmra.mxu0 %v409
        %v691 = vpop.f32.mrf.mxu0
        %v692 = vadd.f32 %v603, %v691
        %v693 = vpop.f32.mrf.mxu0
        %v694 = vadd.f32 %v605, %v693
        %695 = vmatmul.bf16.gmra.mxu0 %v411
        %v696 = vpop.f32.mrf.mxu0
        %v697 = vadd.f32 %v608, %v696
        %v698 = vpop.f32.mrf.mxu0
        %v699 = vadd.f32 %v610, %v698
        %700 = vmatmul.bf16.gmra.mxu0 %v413
        %v701 = vpop.f32.mrf.mxu0
        %v702 = vadd.f32 %v613, %v701
        %v703 = vpop.f32.mrf.mxu0
        %v704 = vadd.f32 %v615, %v703
        %705 = vmatmul.bf16.gmra.mxu0 %v415
        %v706 = vpop.f32.mrf.mxu0
        %v707 = vadd.f32 %v618, %v706
        %v708 = vpop.f32.mrf.mxu0
        %v709 = vadd.f32 %v620, %v708
        %710 = vmatmul.bf16.gmra.mxu0 %v417
        %v711 = vpop.f32.mrf.mxu0
        %v712 = vadd.f32 %v623, %v711
        %v713 = vpop.f32.mrf.mxu0
        %v714 = vadd.f32 %v625, %v713
        %715 = vmatmul.bf16.gmra.mxu0 %v419
        %v716 = vpop.f32.mrf.mxu0
        %v717 = vadd.f32 %v628, %v716
        %v718 = vpop.f32.mrf.mxu0
        %v719 = vadd.f32 %v630, %v718
        %720 = vmatmul.bf16.gmra.mxu0 %v421
        %v721 = vpop.f32.mrf.mxu0
        %v722 = vadd.f32 %v633, %v721
        %v723 = vpop.f32.mrf.mxu0
        %v724 = vadd.f32 %v635, %v723
        %725 = vmatmul.bf16.gmra.mxu0 %v423
        %v726 = vpop.f32.mrf.mxu0
        %v727 = vadd.f32 %v638, %v726
        %v728 = vpop.f32.mrf.mxu0
        %v729 = vadd.f32 %v640, %v728
        %730 = vmatmul.bf16.gmra.mxu0 %v425
        %v731 = vpop.f32.mrf.mxu0
        %v732 = vadd.f32 %v643, %v731
        %v733 = vpop.f32.mrf.mxu0
        %v734 = vadd.f32 %v645, %v733
        %735 = vdwg.mxu0
        %v736 = vmax.f32 %v657, 0.0
        %v737 = vmax.f32 %v659, 0.0
        %v738 = vmax.f32 %v662, 0.0
        %v739 = vmax.f32 %v664, 0.0
        %v740 = vmax.f32 %v667, 0.0
        %v741 = vmax.f32 %v669, 0.0
        %v742 = vmax.f32 %v672, 0.0
        %v743 = vmax.f32 %v674, 0.0
        %v744 = vmax.f32 %v677, 0.0
        %v745 = vmax.f32 %v679, 0.0
        %v746 = vmax.f32 %v682, 0.0
        %v747 = vmax.f32 %v684, 0.0
        %v748 = vmax.f32 %v687, 0.0
        %v749 = vmax.f32 %v689, 0.0
        %v750 = vmax.f32 %v692, 0.0
        %v751 = vmax.f32 %v694, 0.0
        %v752 = vmax.f32 %v697, 0.0
        %v753 = vmax.f32 %v699, 0.0
        %v754 = vmax.f32 %v702, 0.0
        %v755 = vmax.f32 %v704, 0.0
        %v756 = vmax.f32 %v707, 0.0
        %v757 = vmax.f32 %v709, 0.0
        %v758 = vmax.f32 %v712, 0.0
        %v759 = vmax.f32 %v714, 0.0
        %v760 = vmax.f32 %v717, 0.0
        %v761 = vmax.f32 %v719, 0.0
        %v762 = vmax.f32 %v722, 0.0
        %v763 = vmax.f32 %v724, 0.0
        %v764 = vmax.f32 %v727, 0.0
        %v765 = vmax.f32 %v729, 0.0
        %v766 = vmax.f32 %v732, 0.0
        %v767 = vmax.f32 %v734, 0.0
        %v768 = vpack.c.bf16 %v737, %v736
        %v769 = vpack.c.bf16 %v739, %v738
        %v770 = vpack.c.bf16 %v741, %v740
        %v771 = vpack.c.bf16 %v743, %v742
        %v772 = vpack.c.bf16 %v745, %v744
        %v773 = vpack.c.bf16 %v747, %v746
        %v774 = vpack.c.bf16 %v749, %v748
        %v775 = vpack.c.bf16 %v751, %v750
        %v776 = vpack.c.bf16 %v753, %v752
        %v777 = vpack.c.bf16 %v755, %v754
        %v778 = vpack.c.bf16 %v757, %v756
        %v779 = vpack.c.bf16 %v759, %v758
        %v780 = vpack.c.bf16 %v761, %v760
        %v781 = vpack.c.bf16 %v763, %v762
        %v782 = vpack.c.bf16 %v765, %v764
        %v783 = vpack.c.bf16 %v767, %v766
        %v784 = vld [vmem:[#allocation7] sm:$0xf]
        %v785 = vld [vmem:[#allocation7 + $0x4] sm:$0xf]
        %v786 = vld [vmem:[#allocation7 + $0x8] sm:$0xf]
        %v787 = vld [vmem:[#allocation7 + $0xc] sm:$0xf]
        %v788 = vld [vmem:[#allocation7 + $0x10] sm:$0xf]
        %v789 = vld [vmem:[#allocation7 + $0x14] sm:$0xf]
        %v790 = vld [vmem:[#allocation7 + $0x18] sm:$0xf]
        %v791 = vld [vmem:[#allocation7 + $0x1c] sm:$0xf]
        %v792 = vld [vmem:[#allocation7 + $0x20] sm:$0xf]
        %v793 = vld [vmem:[#allocation7 + $0x24] sm:$0xf]
        %v794 = vld [vmem:[#allocation7 + $0x28] sm:$0xf]
        %v795 = vld [vmem:[#allocation7 + $0x2c] sm:$0xf]
        %v796 = vld [vmem:[#allocation7 + $0x30] sm:$0xf]
        %v797 = vld [vmem:[#allocation7 + $0x34] sm:$0xf]
        %v798 = vld [vmem:[#allocation7 + $0x38] sm:$0xf]
        %v799 = vld [vmem:[#allocation7 + $0x3c] sm:$0xf]
        %v800 = vld [vmem:[#allocation10 + $0x1] sm:$0x1]
        %v802 = vperm.slane %v800, 0
        %v820 = vunpack.c.l.b16 %v784
        %v821 = vunpack.c.l.b16 %v785
        %v822 = vunpack.c.l.b16 %v786
        %v823 = vunpack.c.l.b16 %v787
        %v824 = vunpack.c.l.b16 %v788
        %v825 = vunpack.c.l.b16 %v789
        %v826 = vunpack.c.l.b16 %v790
        %v827 = vunpack.c.l.b16 %v791
        %v828 = vunpack.c.l.b16 %v792
        %v829 = vunpack.c.l.b16 %v793
        %v830 = vunpack.c.l.b16 %v794
        %v831 = vunpack.c.l.b16 %v795
        %v832 = vunpack.c.l.b16 %v796
        %v833 = vunpack.c.l.b16 %v797
        %v834 = vunpack.c.l.b16 %v798
        %v835 = vunpack.c.l.b16 %v799
        %v836 = vpack.c.b16 %v821, %v820
        %v837 = vpack.c.b16 %v823, %v822
        %v838 = vpack.c.b16 %v825, %v824
        %v839 = vpack.c.b16 %v827, %v826
        %v840 = vpack.c.b16 %v829, %v828
        %v841 = vpack.c.b16 %v831, %v830
        %v842 = vpack.c.b16 %v833, %v832
        %v843 = vpack.c.b16 %v835, %v834
        %852 = vmatpush.bf16.msra.mxu0 %v843
        %853 = vmatpush.bf16.msra.mxu0 %v842
        %854 = vmatpush.bf16.msra.mxu0 %v841
        %855 = vmatpush.bf16.msra.mxu0 %v840
        %856 = vmatpush.bf16.msra.mxu0 %v839
        %857 = vmatpush.bf16.msra.mxu0 %v838
        %858 = vmatpush.bf16.msra.mxu0 %v837
        %859 = vmatpush.bf16.msra.mxu0 %v836
        %860 = vmatmul.bf16.gmra.mxu0 %v768
        %v861 = vpop.f32.mrf.mxu0
        %v862 = vadd.f32 %v802, %v861
        %v863 = vpop.f32.mrf.mxu0
        %v864 = vadd.f32 %v802, %v863
        %865 = vmatmul.bf16.gmra.mxu0 %v769
        %v866 = vpop.f32.mrf.mxu0
        %v867 = vadd.f32 %v802, %v866
        %v868 = vpop.f32.mrf.mxu0
        %v869 = vadd.f32 %v802, %v868
        %870 = vmatmul.bf16.gmra.mxu0 %v770
        %v871 = vpop.f32.mrf.mxu0
        %v872 = vadd.f32 %v802, %v871
        %v873 = vpop.f32.mrf.mxu0
        %v874 = vadd.f32 %v802, %v873
        %875 = vmatmul.bf16.gmra.mxu0 %v771
        %v876 = vpop.f32.mrf.mxu0
        %v877 = vadd.f32 %v802, %v876
        %v878 = vpop.f32.mrf.mxu0
        %v879 = vadd.f32 %v802, %v878
        %880 = vmatmul.bf16.gmra.mxu0 %v772
        %v881 = vpop.f32.mrf.mxu0
        %v882 = vadd.f32 %v802, %v881
        %v883 = vpop.f32.mrf.mxu0
        %v884 = vadd.f32 %v802, %v883
        %885 = vmatmul.bf16.gmra.mxu0 %v773
        %v886 = vpop.f32.mrf.mxu0
        %v887 = vadd.f32 %v802, %v886
        %v888 = vpop.f32.mrf.mxu0
        %v889 = vadd.f32 %v802, %v888
        %890 = vmatmul.bf16.gmra.mxu0 %v774
        %v891 = vpop.f32.mrf.mxu0
        %v892 = vadd.f32 %v802, %v891
        %v893 = vpop.f32.mrf.mxu0
        %v894 = vadd.f32 %v802, %v893
        %895 = vmatmul.bf16.gmra.mxu0 %v775
        %v896 = vpop.f32.mrf.mxu0
        %v897 = vadd.f32 %v802, %v896
        %v898 = vpop.f32.mrf.mxu0
        %v899 = vadd.f32 %v802, %v898
        %900 = vmatmul.bf16.gmra.mxu0 %v776
        %v901 = vpop.f32.mrf.mxu0
        %v902 = vadd.f32 %v802, %v901
        %v903 = vpop.f32.mrf.mxu0
        %v904 = vadd.f32 %v802, %v903
        %905 = vmatmul.bf16.gmra.mxu0 %v777
        %v906 = vpop.f32.mrf.mxu0
        %v907 = vadd.f32 %v802, %v906
        %v908 = vpop.f32.mrf.mxu0
        %v909 = vadd.f32 %v802, %v908
        %910 = vmatmul.bf16.gmra.mxu0 %v778
        %v911 = vpop.f32.mrf.mxu0
        %v912 = vadd.f32 %v802, %v911
        %v913 = vpop.f32.mrf.mxu0
        %v914 = vadd.f32 %v802, %v913
        %915 = vmatmul.bf16.gmra.mxu0 %v779
        %v916 = vpop.f32.mrf.mxu0
        %v917 = vadd.f32 %v802, %v916
        %v918 = vpop.f32.mrf.mxu0
        %v919 = vadd.f32 %v802, %v918
        %920 = vmatmul.bf16.gmra.mxu0 %v780
        %v921 = vpop.f32.mrf.mxu0
        %v922 = vadd.f32 %v802, %v921
        %v923 = vpop.f32.mrf.mxu0
        %v924 = vadd.f32 %v802, %v923
        %925 = vmatmul.bf16.gmra.mxu0 %v781
        %v926 = vpop.f32.mrf.mxu0
        %v927 = vadd.f32 %v802, %v926
        %v928 = vpop.f32.mrf.mxu0
        %v929 = vadd.f32 %v802, %v928
        %930 = vmatmul.bf16.gmra.mxu0 %v782
        %v931 = vpop.f32.mrf.mxu0
        %v932 = vadd.f32 %v802, %v931
        %v933 = vpop.f32.mrf.mxu0
        %v934 = vadd.f32 %v802, %v933
        %935 = vmatmul.bf16.gmra.mxu0 %v783
        %v936 = vpop.f32.mrf.mxu0
        %v937 = vadd.f32 %v802, %v936
        %v938 = vpop.f32.mrf.mxu0
        %v939 = vadd.f32 %v802, %v938
        %940 = vdwg.mxu0
        %v941 = vmax.f32 %v862, 0.0
        %v942 = vmax.f32 %v864, 0.0
        %v943 = vmax.f32 %v867, 0.0
        %v944 = vmax.f32 %v869, 0.0
        %v945 = vmax.f32 %v872, 0.0
        %v946 = vmax.f32 %v874, 0.0
        %v947 = vmax.f32 %v877, 0.0
        %v948 = vmax.f32 %v879, 0.0
        %v949 = vmax.f32 %v882, 0.0
        %v950 = vmax.f32 %v884, 0.0
        %v951 = vmax.f32 %v887, 0.0
        %v952 = vmax.f32 %v889, 0.0
        %v953 = vmax.f32 %v892, 0.0
        %v954 = vmax.f32 %v894, 0.0
        %v955 = vmax.f32 %v897, 0.0
        %v956 = vmax.f32 %v899, 0.0
        %v957 = vmax.f32 %v902, 0.0
        %v958 = vmax.f32 %v904, 0.0
        %v959 = vmax.f32 %v907, 0.0
        %v960 = vmax.f32 %v909, 0.0
        %v961 = vmax.f32 %v912, 0.0
        %v962 = vmax.f32 %v914, 0.0
        %v963 = vmax.f32 %v917, 0.0
        %v964 = vmax.f32 %v919, 0.0
        %v965 = vmax.f32 %v922, 0.0
        %v966 = vmax.f32 %v924, 0.0
        %v967 = vmax.f32 %v927, 0.0
        %v968 = vmax.f32 %v929, 0.0
        %v969 = vmax.f32 %v932, 0.0
        %v970 = vmax.f32 %v934, 0.0
        %v971 = vmax.f32 %v937, 0.0
        %v972 = vmax.f32 %v939, 0.0
        %v973 = vpack.c.bf16 %v942, %v941
        %v974 = vpack.c.bf16 %v944, %v943
        %v975 = vpack.c.bf16 %v946, %v945
        %v976 = vpack.c.bf16 %v948, %v947
        %v977 = vpack.c.bf16 %v950, %v949
        %v978 = vpack.c.bf16 %v952, %v951
        %v979 = vpack.c.bf16 %v954, %v953
        %v980 = vpack.c.bf16 %v956, %v955
        %v981 = vpack.c.bf16 %v958, %v957
        %v982 = vpack.c.bf16 %v960, %v959
        %v983 = vpack.c.bf16 %v962, %v961
        %v984 = vpack.c.bf16 %v964, %v963
        %v985 = vpack.c.bf16 %v966, %v965
        %v986 = vpack.c.bf16 %v968, %v967
        %v987 = vpack.c.bf16 %v970, %v969
        %v988 = vpack.c.bf16 %v972, %v971
        %v989 = vld [vmem:[#allocation8] sm:$0xff]
        %v990 = vld [vmem:[#allocation8 + $0x8] sm:$0xff]
        %v991 = vld [vmem:[#allocation8 + $0x10] sm:$0xff]
        %v992 = vld [vmem:[#allocation8 + $0x18] sm:$0xff]
        %v993 = vld [vmem:[#allocation8 + $0x20] sm:$0xff]
        %v994 = vld [vmem:[#allocation8 + $0x28] sm:$0xff]
        %v995 = vld [vmem:[#allocation8 + $0x30] sm:$0xff]
        %v996 = vld [vmem:[#allocation8 + $0x38] sm:$0xff]
        %v997 = vld [vmem:[#allocation8 + $0x40] sm:$0xff]
        %v998 = vld [vmem:[#allocation8 + $0x48] sm:$0xff]
        %v999 = vld [vmem:[#allocation8 + $0x50] sm:$0xff]
        %v1000 = vld [vmem:[#allocation8 + $0x58] sm:$0xff]
        %v1001 = vld [vmem:[#allocation8 + $0x60] sm:$0xff]
        %v1002 = vld [vmem:[#allocation8 + $0x68] sm:$0xff]
        %v1003 = vld [vmem:[#allocation8 + $0x70] sm:$0xff]
        %v1004 = vld [vmem:[#allocation8 + $0x78] sm:$0xff]
        %v1005 = vld [vmem:[#allocation10 + $0x2] sm:$0x3]
        %v1007 = vperm.slane %v1005, 0
        %v1008 = vperm.slane %v1005, 1
        %v1027 = vunpack.c.l.b16 %v989
        %v1028 = vunpack.c.h.b16 %v989
        %v1029 = vunpack.c.l.b16 %v990
        %v1030 = vunpack.c.h.b16 %v990
        %v1031 = vunpack.c.l.b16 %v991
        %v1032 = vunpack.c.h.b16 %v991
        %v1033 = vunpack.c.l.b16 %v992
        %v1034 = vunpack.c.h.b16 %v992
        %v1035 = vunpack.c.l.b16 %v993
        %v1036 = vunpack.c.h.b16 %v993
        %v1037 = vunpack.c.l.b16 %v994
        %v1038 = vunpack.c.h.b16 %v994
        %v1039 = vunpack.c.l.b16 %v995
        %v1040 = vunpack.c.h.b16 %v995
        %v1041 = vunpack.c.l.b16 %v996
        %v1042 = vunpack.c.h.b16 %v996
        %v1043 = vunpack.c.l.b16 %v997
        %v1044 = vunpack.c.h.b16 %v997
        %v1045 = vunpack.c.l.b16 %v998
        %v1046 = vunpack.c.h.b16 %v998
        %v1047 = vunpack.c.l.b16 %v999
        %v1048 = vunpack.c.h.b16 %v999
        %v1049 = vunpack.c.l.b16 %v1000
        %v1050 = vunpack.c.h.b16 %v1000
        %v1051 = vunpack.c.l.b16 %v1001
        %v1052 = vunpack.c.h.b16 %v1001
        %v1053 = vunpack.c.l.b16 %v1002
        %v1054 = vunpack.c.h.b16 %v1002
        %v1055 = vunpack.c.l.b16 %v1003
        %v1056 = vunpack.c.h.b16 %v1003
        %v1057 = vunpack.c.l.b16 %v1004
        %v1058 = vunpack.c.h.b16 %v1004
        %v1059 = vpack.c.b16 %v1029, %v1027
        %v1060 = vpack.c.b16 %v1030, %v1028
        %v1061 = vpack.c.b16 %v1033, %v1031
        %v1062 = vpack.c.b16 %v1034, %v1032
        %v1063 = vpack.c.b16 %v1037, %v1035
        %v1064 = vpack.c.b16 %v1038, %v1036
        %v1065 = vpack.c.b16 %v1041, %v1039
        %v1066 = vpack.c.b16 %v1042, %v1040
        %v1067 = vpack.c.b16 %v1045, %v1043
        %v1068 = vpack.c.b16 %v1046, %v1044
        %v1069 = vpack.c.b16 %v1049, %v1047
        %v1070 = vpack.c.b16 %v1050, %v1048
        %v1071 = vpack.c.b16 %v1053, %v1051
        %v1072 = vpack.c.b16 %v1054, %v1052
        %v1073 = vpack.c.b16 %v1057, %v1055
        %v1074 = vpack.c.b16 %v1058, %v1056
        %1091 = vmatpush.bf16.msra.mxu0 %v1073
        %1092 = vmatpush.bf16.msra.mxu0 %v1071
        %1093 = vmatpush.bf16.msra.mxu0 %v1069
        %1094 = vmatpush.bf16.msra.mxu0 %v1067
        %1095 = vmatpush.bf16.msra.mxu0 %v1065
        %1096 = vmatpush.bf16.msra.mxu0 %v1063
        %1097 = vmatpush.bf16.msra.mxu0 %v1061
        %1098 = vmatpush.bf16.msra.mxu0 %v1059
        %1099 = vmatmul.bf16.gmra.mxu0 %v973
        %v1100 = vpop.f32.mrf.mxu0
        %v1101 = vadd.f32 %v1007, %v1100
        %v1102 = vpop.f32.mrf.mxu0
        %v1103 = vadd.f32 %v1007, %v1102
        %1104 = vmatmul.bf16.gmra.mxu0 %v974
        %v1105 = vpop.f32.mrf.mxu0
        %v1106 = vadd.f32 %v1007, %v1105
        %v1107 = vpop.f32.mrf.mxu0
        %v1108 = vadd.f32 %v1007, %v1107
        %1109 = vmatmul.bf16.gmra.mxu0 %v975
        %v1110 = vpop.f32.mrf.mxu0
        %v1111 = vadd.f32 %v1007, %v1110
        %v1112 = vpop.f32.mrf.mxu0
        %v1113 = vadd.f32 %v1007, %v1112
        %1114 = vmatmul.bf16.gmra.mxu0 %v976
        %v1115 = vpop.f32.mrf.mxu0
        %v1116 = vadd.f32 %v1007, %v1115
        %v1117 = vpop.f32.mrf.mxu0
        %v1118 = vadd.f32 %v1007, %v1117
        %1119 = vmatmul.bf16.gmra.mxu0 %v977
        %v1120 = vpop.f32.mrf.mxu0
        %v1121 = vadd.f32 %v1007, %v1120
        %v1122 = vpop.f32.mrf.mxu0
        %v1123 = vadd.f32 %v1007, %v1122
        %1124 = vmatmul.bf16.gmra.mxu0 %v978
        %v1125 = vpop.f32.mrf.mxu0
        %v1126 = vadd.f32 %v1007, %v1125
        %v1127 = vpop.f32.mrf.mxu0
        %v1128 = vadd.f32 %v1007, %v1127
        %1129 = vmatmul.bf16.gmra.mxu0 %v979
        %v1130 = vpop.f32.mrf.mxu0
        %v1131 = vadd.f32 %v1007, %v1130
        %v1132 = vpop.f32.mrf.mxu0
        %v1133 = vadd.f32 %v1007, %v1132
        %1134 = vmatmul.bf16.gmra.mxu0 %v980
        %v1135 = vpop.f32.mrf.mxu0
        %v1136 = vadd.f32 %v1007, %v1135
        %v1137 = vpop.f32.mrf.mxu0
        %v1138 = vadd.f32 %v1007, %v1137
        %1139 = vmatmul.bf16.gmra.mxu0 %v981
        %v1140 = vpop.f32.mrf.mxu0
        %v1141 = vadd.f32 %v1007, %v1140
        %v1142 = vpop.f32.mrf.mxu0
        %v1143 = vadd.f32 %v1007, %v1142
        %1144 = vmatmul.bf16.gmra.mxu0 %v982
        %v1145 = vpop.f32.mrf.mxu0
        %v1146 = vadd.f32 %v1007, %v1145
        %v1147 = vpop.f32.mrf.mxu0
        %v1148 = vadd.f32 %v1007, %v1147
        %1149 = vmatmul.bf16.gmra.mxu0 %v983
        %v1150 = vpop.f32.mrf.mxu0
        %v1151 = vadd.f32 %v1007, %v1150
        %v1152 = vpop.f32.mrf.mxu0
        %v1153 = vadd.f32 %v1007, %v1152
        %1154 = vmatmul.bf16.gmra.mxu0 %v984
        %v1155 = vpop.f32.mrf.mxu0
        %v1156 = vadd.f32 %v1007, %v1155
        %v1157 = vpop.f32.mrf.mxu0
        %v1158 = vadd.f32 %v1007, %v1157
        %1159 = vmatmul.bf16.gmra.mxu0 %v985
        %v1160 = vpop.f32.mrf.mxu0
        %v1161 = vadd.f32 %v1007, %v1160
        %v1162 = vpop.f32.mrf.mxu0
        %v1163 = vadd.f32 %v1007, %v1162
        %1164 = vmatmul.bf16.gmra.mxu0 %v986
        %v1165 = vpop.f32.mrf.mxu0
        %v1166 = vadd.f32 %v1007, %v1165
        %v1167 = vpop.f32.mrf.mxu0
        %v1168 = vadd.f32 %v1007, %v1167
        %1169 = vmatmul.bf16.gmra.mxu0 %v987
        %v1170 = vpop.f32.mrf.mxu0
        %v1171 = vadd.f32 %v1007, %v1170
        %v1172 = vpop.f32.mrf.mxu0
        %v1173 = vadd.f32 %v1007, %v1172
        %1174 = vmatmul.bf16.gmra.mxu0 %v988
        %v1175 = vpop.f32.mrf.mxu0
        %v1176 = vadd.f32 %v1007, %v1175
        %v1177 = vpop.f32.mrf.mxu0
        %v1178 = vadd.f32 %v1007, %v1177
        %1179 = vdwg.mxu0
        %1180 = vmatpush.bf16.msra.mxu0 %v1074
        %1181 = vmatpush.bf16.msra.mxu0 %v1072
        %1182 = vmatpush.bf16.msra.mxu0 %v1070
        %1183 = vmatpush.bf16.msra.mxu0 %v1068
        %1184 = vmatpush.bf16.msra.mxu0 %v1066
        %1185 = vmatpush.bf16.msra.mxu0 %v1064
        %1186 = vmatpush.bf16.msra.mxu0 %v1062
        %1187 = vmatpush.bf16.msra.mxu0 %v1060
        %1188 = vmatmul.bf16.gmra.mxu0 %v973
        %v1189 = vpop.f32.mrf.mxu0
        %v1190 = vadd.f32 %v1008, %v1189
        %v1191 = vpop.f32.mrf.mxu0
        %v1192 = vadd.f32 %v1008, %v1191
        %1193 = vmatmul.bf16.gmra.mxu0 %v974
        %v1194 = vpop.f32.mrf.mxu0
        %v1195 = vadd.f32 %v1008, %v1194
        %v1196 = vpop.f32.mrf.mxu0
        %v1197 = vadd.f32 %v1008, %v1196
        %1198 = vmatmul.bf16.gmra.mxu0 %v975
        %v1199 = vpop.f32.mrf.mxu0
        %v1200 = vadd.f32 %v1008, %v1199
        %v1201 = vpop.f32.mrf.mxu0
        %v1202 = vadd.f32 %v1008, %v1201
        %1203 = vmatmul.bf16.gmra.mxu0 %v976
        %v1204 = vpop.f32.mrf.mxu0
        %v1205 = vadd.f32 %v1008, %v1204
        %v1206 = vpop.f32.mrf.mxu0
        %v1207 = vadd.f32 %v1008, %v1206
        %1208 = vmatmul.bf16.gmra.mxu0 %v977
        %v1209 = vpop.f32.mrf.mxu0
        %v1210 = vadd.f32 %v1008, %v1209
        %v1211 = vpop.f32.mrf.mxu0
        %v1212 = vadd.f32 %v1008, %v1211
        %1213 = vmatmul.bf16.gmra.mxu0 %v978
        %v1214 = vpop.f32.mrf.mxu0
        %v1215 = vadd.f32 %v1008, %v1214
        %v1216 = vpop.f32.mrf.mxu0
        %v1217 = vadd.f32 %v1008, %v1216
        %1218 = vmatmul.bf16.gmra.mxu0 %v979
        %v1219 = vpop.f32.mrf.mxu0
        %v1220 = vadd.f32 %v1008, %v1219
        %v1221 = vpop.f32.mrf.mxu0
        %v1222 = vadd.f32 %v1008, %v1221
        %1223 = vmatmul.bf16.gmra.mxu0 %v980
        %v1224 = vpop.f32.mrf.mxu0
        %v1225 = vadd.f32 %v1008, %v1224
        %v1226 = vpop.f32.mrf.mxu0
        %v1227 = vadd.f32 %v1008, %v1226
        %1228 = vmatmul.bf16.gmra.mxu0 %v981
        %v1229 = vpop.f32.mrf.mxu0
        %v1230 = vadd.f32 %v1008, %v1229
        %v1231 = vpop.f32.mrf.mxu0
        %v1232 = vadd.f32 %v1008, %v1231
        %1233 = vmatmul.bf16.gmra.mxu0 %v982
        %v1234 = vpop.f32.mrf.mxu0
        %v1235 = vadd.f32 %v1008, %v1234
        %v1236 = vpop.f32.mrf.mxu0
        %v1237 = vadd.f32 %v1008, %v1236
        %1238 = vmatmul.bf16.gmra.mxu0 %v983
        %v1239 = vpop.f32.mrf.mxu0
        %v1240 = vadd.f32 %v1008, %v1239
        %v1241 = vpop.f32.mrf.mxu0
        %v1242 = vadd.f32 %v1008, %v1241
        %1243 = vmatmul.bf16.gmra.mxu0 %v984
        %v1244 = vpop.f32.mrf.mxu0
        %v1245 = vadd.f32 %v1008, %v1244
        %v1246 = vpop.f32.mrf.mxu0
        %v1247 = vadd.f32 %v1008, %v1246
        %1248 = vmatmul.bf16.gmra.mxu0 %v985
        %v1249 = vpop.f32.mrf.mxu0
        %v1250 = vadd.f32 %v1008, %v1249
        %v1251 = vpop.f32.mrf.mxu0
        %v1252 = vadd.f32 %v1008, %v1251
        %1253 = vmatmul.bf16.gmra.mxu0 %v986
        %v1254 = vpop.f32.mrf.mxu0
        %v1255 = vadd.f32 %v1008, %v1254
        %v1256 = vpop.f32.mrf.mxu0
        %v1257 = vadd.f32 %v1008, %v1256
        %1258 = vmatmul.bf16.gmra.mxu0 %v987
        %v1259 = vpop.f32.mrf.mxu0
        %v1260 = vadd.f32 %v1008, %v1259
        %v1261 = vpop.f32.mrf.mxu0
        %v1262 = vadd.f32 %v1008, %v1261
        %1263 = vmatmul.bf16.gmra.mxu0 %v988
        %v1264 = vpop.f32.mrf.mxu0
        %v1265 = vadd.f32 %v1008, %v1264
        %v1266 = vpop.f32.mrf.mxu0
        %v1267 = vadd.f32 %v1008, %v1266
        %1268 = vdwg.mxu0
        %v1269 = vxor.u32 %v1101, 2147483648
        %v1270 = vxor.u32 %v1190, 2147483648
        %v1271 = vxor.u32 %v1103, 2147483648
        %v1272 = vxor.u32 %v1192, 2147483648
        %v1273 = vxor.u32 %v1106, 2147483648
        %v1274 = vxor.u32 %v1195, 2147483648
        %v1275 = vxor.u32 %v1108, 2147483648
        %v1276 = vxor.u32 %v1197, 2147483648
        %v1277 = vxor.u32 %v1111, 2147483648
        %v1278 = vxor.u32 %v1200, 2147483648
        %v1279 = vxor.u32 %v1113, 2147483648
        %v1280 = vxor.u32 %v1202, 2147483648
        %v1281 = vxor.u32 %v1116, 2147483648
        %v1282 = vxor.u32 %v1205, 2147483648
        %v1283 = vxor.u32 %v1118, 2147483648
        %v1284 = vxor.u32 %v1207, 2147483648
        %v1285 = vxor.u32 %v1121, 2147483648
        %v1286 = vxor.u32 %v1210, 2147483648
        %v1287 = vxor.u32 %v1123, 2147483648
        %v1288 = vxor.u32 %v1212, 2147483648
        %v1289 = vxor.u32 %v1126, 2147483648
        %v1290 = vxor.u32 %v1215, 2147483648
        %v1291 = vxor.u32 %v1128, 2147483648
        %v1292 = vxor.u32 %v1217, 2147483648
        %v1293 = vxor.u32 %v1131, 2147483648
        %v1294 = vxor.u32 %v1220, 2147483648
        %v1295 = vxor.u32 %v1133, 2147483648
        %v1296 = vxor.u32 %v1222, 2147483648
        %v1297 = vxor.u32 %v1136, 2147483648
        %v1298 = vxor.u32 %v1225, 2147483648
        %v1299 = vxor.u32 %v1138, 2147483648
        %v1300 = vxor.u32 %v1227, 2147483648
        %v1301 = vxor.u32 %v1141, 2147483648
        %v1302 = vxor.u32 %v1230, 2147483648
        %v1303 = vxor.u32 %v1143, 2147483648
        %v1304 = vxor.u32 %v1232, 2147483648
        %v1305 = vxor.u32 %v1146, 2147483648
        %v1306 = vxor.u32 %v1235, 2147483648
        %v1307 = vxor.u32 %v1148, 2147483648
        %v1308 = vxor.u32 %v1237, 2147483648
        %v1309 = vxor.u32 %v1151, 2147483648
        %v1310 = vxor.u32 %v1240, 2147483648
        %v1311 = vxor.u32 %v1153, 2147483648
        %v1312 = vxor.u32 %v1242, 2147483648
        %v1313 = vxor.u32 %v1156, 2147483648
        %v1314 = vxor.u32 %v1245, 2147483648
        %v1315 = vxor.u32 %v1158, 2147483648
        %v1316 = vxor.u32 %v1247, 2147483648
        %v1317 = vxor.u32 %v1161, 2147483648
        %v1318 = vxor.u32 %v1250, 2147483648
        %v1319 = vxor.u32 %v1163, 2147483648
        %v1320 = vxor.u32 %v1252, 2147483648
        %v1321 = vxor.u32 %v1166, 2147483648
        %v1322 = vxor.u32 %v1255, 2147483648
        %v1323 = vxor.u32 %v1168, 2147483648
        %v1324 = vxor.u32 %v1257, 2147483648
        %v1325 = vxor.u32 %v1171, 2147483648
        %v1326 = vxor.u32 %v1260, 2147483648
        %v1327 = vxor.u32 %v1173, 2147483648
        %v1328 = vxor.u32 %v1262, 2147483648
        %v1329 = vxor.u32 %v1176, 2147483648
        %v1330 = vxor.u32 %v1265, 2147483648
        %v1331 = vxor.u32 %v1178, 2147483648
        %v1332 = vxor.u32 %v1267, 2147483648
        %v1333 = vmul.f32 %v1269, 1.442695
        %v1334 = vpow.pop %v1333
        %v1335 = vmul.f32 %v1270, 1.442695
        %v1336 = vpow.pop %v1335
        %v1337 = vmul.f32 %v1271, 1.442695
        %v1338 = vpow.pop %v1337
        %v1339 = vmul.f32 %v1272, 1.442695
        %v1340 = vpow.pop %v1339
        %v1341 = vmul.f32 %v1273, 1.442695
        %v1342 = vpow.pop %v1341
        %v1343 = vmul.f32 %v1274, 1.442695
        %v1344 = vpow.pop %v1343
        %v1345 = vmul.f32 %v1275, 1.442695
        %v1346 = vpow.pop %v1345
        %v1347 = vmul.f32 %v1276, 1.442695
        %v1348 = vpow.pop %v1347
        %v1349 = vmul.f32 %v1277, 1.442695
        %v1350 = vpow.pop %v1349
        %v1351 = vmul.f32 %v1278, 1.442695
        %v1352 = vpow.pop %v1351
        %v1353 = vmul.f32 %v1279, 1.442695
        %v1354 = vpow.pop %v1353
        %v1355 = vmul.f32 %v1280, 1.442695
        %v1356 = vpow.pop %v1355
        %v1357 = vmul.f32 %v1281, 1.442695
        %v1358 = vpow.pop %v1357
        %v1359 = vmul.f32 %v1282, 1.442695
        %v1360 = vpow.pop %v1359
        %v1361 = vmul.f32 %v1283, 1.442695
        %v1362 = vpow.pop %v1361
        %v1363 = vmul.f32 %v1284, 1.442695
        %v1364 = vpow.pop %v1363
        %v1365 = vmul.f32 %v1285, 1.442695
        %v1366 = vpow.pop %v1365
        %v1367 = vmul.f32 %v1286, 1.442695
        %v1368 = vpow.pop %v1367
        %v1369 = vmul.f32 %v1287, 1.442695
        %v1370 = vpow.pop %v1369
        %v1371 = vmul.f32 %v1288, 1.442695
        %v1372 = vpow.pop %v1371
        %v1373 = vmul.f32 %v1289, 1.442695
        %v1374 = vpow.pop %v1373
        %v1375 = vmul.f32 %v1290, 1.442695
        %v1376 = vpow.pop %v1375
        %v1377 = vmul.f32 %v1291, 1.442695
        %v1378 = vpow.pop %v1377
        %v1379 = vmul.f32 %v1292, 1.442695
        %v1380 = vpow.pop %v1379
        %v1381 = vmul.f32 %v1293, 1.442695
        %v1382 = vpow.pop %v1381
        %v1383 = vmul.f32 %v1294, 1.442695
        %v1384 = vpow.pop %v1383
        %v1385 = vmul.f32 %v1295, 1.442695
        %v1386 = vpow.pop %v1385
        %v1387 = vmul.f32 %v1296, 1.442695
        %v1388 = vpow.pop %v1387
        %v1389 = vmul.f32 %v1297, 1.442695
        %v1390 = vpow.pop %v1389
        %v1391 = vmul.f32 %v1298, 1.442695
        %v1392 = vpow.pop %v1391
        %v1393 = vmul.f32 %v1299, 1.442695
        %v1394 = vpow.pop %v1393
        %v1395 = vmul.f32 %v1300, 1.442695
        %v1396 = vpow.pop %v1395
        %v1397 = vmul.f32 %v1301, 1.442695
        %v1398 = vpow.pop %v1397
        %v1399 = vmul.f32 %v1302, 1.442695
        %v1400 = vpow.pop %v1399
        %v1401 = vmul.f32 %v1303, 1.442695
        %v1402 = vpow.pop %v1401
        %v1403 = vmul.f32 %v1304, 1.442695
        %v1404 = vpow.pop %v1403
        %v1405 = vmul.f32 %v1305, 1.442695
        %v1406 = vpow.pop %v1405
        %v1407 = vmul.f32 %v1306, 1.442695
        %v1408 = vpow.pop %v1407
        %v1409 = vmul.f32 %v1307, 1.442695
        %v1410 = vpow.pop %v1409
        %v1411 = vmul.f32 %v1308, 1.442695
        %v1412 = vpow.pop %v1411
        %v1413 = vmul.f32 %v1309, 1.442695
        %v1414 = vpow.pop %v1413
        %v1415 = vmul.f32 %v1310, 1.442695
        %v1416 = vpow.pop %v1415
        %v1417 = vmul.f32 %v1311, 1.442695
        %v1418 = vpow.pop %v1417
        %v1419 = vmul.f32 %v1312, 1.442695
        %v1420 = vpow.pop %v1419
        %v1421 = vmul.f32 %v1313, 1.442695
        %v1422 = vpow.pop %v1421
        %v1423 = vmul.f32 %v1314, 1.442695
        %v1424 = vpow.pop %v1423
        %v1425 = vmul.f32 %v1315, 1.442695
        %v1426 = vpow.pop %v1425
        %v1427 = vmul.f32 %v1316, 1.442695
        %v1428 = vpow.pop %v1427
        %v1429 = vmul.f32 %v1317, 1.442695
        %v1430 = vpow.pop %v1429
        %v1431 = vmul.f32 %v1318, 1.442695
        %v1432 = vpow.pop %v1431
        %v1433 = vmul.f32 %v1319, 1.442695
        %v1434 = vpow.pop %v1433
        %v1435 = vmul.f32 %v1320, 1.442695
        %v1436 = vpow.pop %v1435
        %v1437 = vmul.f32 %v1321, 1.442695
        %v1438 = vpow.pop %v1437
        %v1439 = vmul.f32 %v1322, 1.442695
        %v1440 = vpow.pop %v1439
        %v1441 = vmul.f32 %v1323, 1.442695
        %v1442 = vpow.pop %v1441
        %v1443 = vmul.f32 %v1324, 1.442695
        %v1444 = vpow.pop %v1443
        %v1445 = vmul.f32 %v1325, 1.442695
        %v1446 = vpow.pop %v1445
        %v1447 = vmul.f32 %v1326, 1.442695
        %v1448 = vpow.pop %v1447
        %v1449 = vmul.f32 %v1327, 1.442695
        %v1450 = vpow.pop %v1449
        %v1451 = vmul.f32 %v1328, 1.442695
        %v1452 = vpow.pop %v1451
        %v1453 = vmul.f32 %v1329, 1.442695
        %v1454 = vpow.pop %v1453
        %v1455 = vmul.f32 %v1330, 1.442695
        %v1456 = vpow.pop %v1455
        %v1457 = vmul.f32 %v1331, 1.442695
        %v1458 = vpow.pop %v1457
        %v1459 = vmul.f32 %v1332, 1.442695
        %v1460 = vpow.pop %v1459
        %v1461 = vadd.f32 %v1334, 1.0
        %v1462 = vadd.f32 %v1336, 1.0
        %v1463 = vadd.f32 %v1338, 1.0
        %v1464 = vadd.f32 %v1340, 1.0
        %v1465 = vadd.f32 %v1342, 1.0
        %v1466 = vadd.f32 %v1344, 1.0
        %v1467 = vadd.f32 %v1346, 1.0
        %v1468 = vadd.f32 %v1348, 1.0
        %v1469 = vadd.f32 %v1350, 1.0
        %v1470 = vadd.f32 %v1352, 1.0
        %v1471 = vadd.f32 %v1354, 1.0
        %v1472 = vadd.f32 %v1356, 1.0
        %v1473 = vadd.f32 %v1358, 1.0
        %v1474 = vadd.f32 %v1360, 1.0
        %v1475 = vadd.f32 %v1362, 1.0
        %v1476 = vadd.f32 %v1364, 1.0
        %v1477 = vadd.f32 %v1366, 1.0
        %v1478 = vadd.f32 %v1368, 1.0
        %v1479 = vadd.f32 %v1370, 1.0
        %v1480 = vadd.f32 %v1372, 1.0
        %v1481 = vadd.f32 %v1374, 1.0
        %v1482 = vadd.f32 %v1376, 1.0
        %v1483 = vadd.f32 %v1378, 1.0
        %v1484 = vadd.f32 %v1380, 1.0
        %v1485 = vadd.f32 %v1382, 1.0
        %v1486 = vadd.f32 %v1384, 1.0
        %v1487 = vadd.f32 %v1386, 1.0
        %v1488 = vadd.f32 %v1388, 1.0
        %v1489 = vadd.f32 %v1390, 1.0
        %v1490 = vadd.f32 %v1392, 1.0
        %v1491 = vadd.f32 %v1394, 1.0
        %v1492 = vadd.f32 %v1396, 1.0
        %v1493 = vadd.f32 %v1398, 1.0
        %v1494 = vadd.f32 %v1400, 1.0
        %v1495 = vadd.f32 %v1402, 1.0
        %v1496 = vadd.f32 %v1404, 1.0
        %v1497 = vadd.f32 %v1406, 1.0
        %v1498 = vadd.f32 %v1408, 1.0
        %v1499 = vadd.f32 %v1410, 1.0
        %v1500 = vadd.f32 %v1412, 1.0
        %v1501 = vadd.f32 %v1414, 1.0
        %v1502 = vadd.f32 %v1416, 1.0
        %v1503 = vadd.f32 %v1418, 1.0
        %v1504 = vadd.f32 %v1420, 1.0
        %v1505 = vadd.f32 %v1422, 1.0
        %v1506 = vadd.f32 %v1424, 1.0
        %v1507 = vadd.f32 %v1426, 1.0
        %v1508 = vadd.f32 %v1428, 1.0
        %v1509 = vadd.f32 %v1430, 1.0
        %v1510 = vadd.f32 %v1432, 1.0
        %v1511 = vadd.f32 %v1434, 1.0
        %v1512 = vadd.f32 %v1436, 1.0
        %v1513 = vadd.f32 %v1438, 1.0
        %v1514 = vadd.f32 %v1440, 1.0
        %v1515 = vadd.f32 %v1442, 1.0
        %v1516 = vadd.f32 %v1444, 1.0
        %v1517 = vadd.f32 %v1446, 1.0
        %v1518 = vadd.f32 %v1448, 1.0
        %v1519 = vadd.f32 %v1450, 1.0
        %v1520 = vadd.f32 %v1452, 1.0
        %v1521 = vadd.f32 %v1454, 1.0
        %v1522 = vadd.f32 %v1456, 1.0
        %v1523 = vadd.f32 %v1458, 1.0
        %v1524 = vadd.f32 %v1460, 1.0
        %v1525 = vrcp.pop %v1461
        %v1526 = vmul.f32 %v1461, %v1525
        %v1527 = vsub.f32 1.0, %v1526
        %v1528 = vmul.f32 %v1525, %v1527
        %v1529 = vadd.f32 %v1525, %v1528
        %vm1530 = vweird.f32 %v1461
        %vm1531 = vweird.f32 %v1525
        %vm1532 = vmor %vm1530, %vm1531
        %v1533 = vsel %vm1532, %v1525, %v1529
        %v1534 = vand.u32 2147483647, %v1461
        %vm1535 = vcmp.eq.f32.partialorder %v1534, 8.507059e+37
        %v1536 = vand.u32 %v1461, 2147483648
        %v1537 = vor.u32 1.1754944e-38, %v1536
        %v1538 = vsel %vm1535, %v1537, %v1533
        %v1539 = vmul.f32 1.0, %v1538
        %v1540 = vrcp.pop %v1462
        %v1541 = vmul.f32 %v1462, %v1540
        %v1542 = vsub.f32 1.0, %v1541
        %v1543 = vmul.f32 %v1540, %v1542
        %v1544 = vadd.f32 %v1540, %v1543
        %vm1545 = vweird.f32 %v1462
        %vm1546 = vweird.f32 %v1540
        %vm1547 = vmor %vm1545, %vm1546
        %v1548 = vsel %vm1547, %v1540, %v1544
        %v1549 = vand.u32 2147483647, %v1462
        %vm1550 = vcmp.eq.f32.partialorder %v1549, 8.507059e+37
        %v1551 = vand.u32 %v1462, 2147483648
        %v1552 = vor.u32 1.1754944e-38, %v1551
        %v1553 = vsel %vm1550, %v1552, %v1548
        %v1554 = vmul.f32 1.0, %v1553
        %v1555 = vrcp.pop %v1463
        %v1556 = vmul.f32 %v1463, %v1555
        %v1557 = vsub.f32 1.0, %v1556
        %v1558 = vmul.f32 %v1555, %v1557
        %v1559 = vadd.f32 %v1555, %v1558
        %vm1560 = vweird.f32 %v1463
        %vm1561 = vweird.f32 %v1555
        %vm1562 = vmor %vm1560, %vm1561
        %v1563 = vsel %vm1562, %v1555, %v1559
        %v1564 = vand.u32 2147483647, %v1463
        %vm1565 = vcmp.eq.f32.partialorder %v1564, 8.507059e+37
        %v1566 = vand.u32 %v1463, 2147483648
        %v1567 = vor.u32 1.1754944e-38, %v1566
        %v1568 = vsel %vm1565, %v1567, %v1563
        %v1569 = vmul.f32 1.0, %v1568
        %v1570 = vrcp.pop %v1464
        %v1571 = vmul.f32 %v1464, %v1570
        %v1572 = vsub.f32 1.0, %v1571
        %v1573 = vmul.f32 %v1570, %v1572
        %v1574 = vadd.f32 %v1570, %v1573
        %vm1575 = vweird.f32 %v1464
        %vm1576 = vweird.f32 %v1570
        %vm1577 = vmor %vm1575, %vm1576
        %v1578 = vsel %vm1577, %v1570, %v1574
        %v1579 = vand.u32 2147483647, %v1464
        %vm1580 = vcmp.eq.f32.partialorder %v1579, 8.507059e+37
        %v1581 = vand.u32 %v1464, 2147483648
        %v1582 = vor.u32 1.1754944e-38, %v1581
        %v1583 = vsel %vm1580, %v1582, %v1578
        %v1584 = vmul.f32 1.0, %v1583
        %v1585 = vrcp.pop %v1465
        %v1586 = vmul.f32 %v1465, %v1585
        %v1587 = vsub.f32 1.0, %v1586
        %v1588 = vmul.f32 %v1585, %v1587
        %v1589 = vadd.f32 %v1585, %v1588
        %vm1590 = vweird.f32 %v1465
        %vm1591 = vweird.f32 %v1585
        %vm1592 = vmor %vm1590, %vm1591
        %v1593 = vsel %vm1592, %v1585, %v1589
        %v1594 = vand.u32 2147483647, %v1465
        %vm1595 = vcmp.eq.f32.partialorder %v1594, 8.507059e+37
        %v1596 = vand.u32 %v1465, 2147483648
        %v1597 = vor.u32 1.1754944e-38, %v1596
        %v1598 = vsel %vm1595, %v1597, %v1593
        %v1599 = vmul.f32 1.0, %v1598
        %v1600 = vrcp.pop %v1466
        %v1601 = vmul.f32 %v1466, %v1600
        %v1602 = vsub.f32 1.0, %v1601
        %v1603 = vmul.f32 %v1600, %v1602
        %v1604 = vadd.f32 %v1600, %v1603
        %vm1605 = vweird.f32 %v1466
        %vm1606 = vweird.f32 %v1600
        %vm1607 = vmor %vm1605, %vm1606
        %v1608 = vsel %vm1607, %v1600, %v1604
        %v1609 = vand.u32 2147483647, %v1466
        %vm1610 = vcmp.eq.f32.partialorder %v1609, 8.507059e+37
        %v1611 = vand.u32 %v1466, 2147483648
        %v1612 = vor.u32 1.1754944e-38, %v1611
        %v1613 = vsel %vm1610, %v1612, %v1608
        %v1614 = vmul.f32 1.0, %v1613
        %v1615 = vrcp.pop %v1467
        %v1616 = vmul.f32 %v1467, %v1615
        %v1617 = vsub.f32 1.0, %v1616
        %v1618 = vmul.f32 %v1615, %v1617
        %v1619 = vadd.f32 %v1615, %v1618
        %vm1620 = vweird.f32 %v1467
        %vm1621 = vweird.f32 %v1615
        %vm1622 = vmor %vm1620, %vm1621
        %v1623 = vsel %vm1622, %v1615, %v1619
        %v1624 = vand.u32 2147483647, %v1467
        %vm1625 = vcmp.eq.f32.partialorder %v1624, 8.507059e+37
        %v1626 = vand.u32 %v1467, 2147483648
        %v1627 = vor.u32 1.1754944e-38, %v1626
        %v1628 = vsel %vm1625, %v1627, %v1623
        %v1629 = vmul.f32 1.0, %v1628
        %v1630 = vrcp.pop %v1468
        %v1631 = vmul.f32 %v1468, %v1630
        %v1632 = vsub.f32 1.0, %v1631
        %v1633 = vmul.f32 %v1630, %v1632
        %v1634 = vadd.f32 %v1630, %v1633
        %vm1635 = vweird.f32 %v1468
        %vm1636 = vweird.f32 %v1630
        %vm1637 = vmor %vm1635, %vm1636
        %v1638 = vsel %vm1637, %v1630, %v1634
        %v1639 = vand.u32 2147483647, %v1468
        %vm1640 = vcmp.eq.f32.partialorder %v1639, 8.507059e+37
        %v1641 = vand.u32 %v1468, 2147483648
        %v1642 = vor.u32 1.1754944e-38, %v1641
        %v1643 = vsel %vm1640, %v1642, %v1638
        %v1644 = vmul.f32 1.0, %v1643
        %v1645 = vrcp.pop %v1469
        %v1646 = vmul.f32 %v1469, %v1645
        %v1647 = vsub.f32 1.0, %v1646
        %v1648 = vmul.f32 %v1645, %v1647
        %v1649 = vadd.f32 %v1645, %v1648
        %vm1650 = vweird.f32 %v1469
        %vm1651 = vweird.f32 %v1645
        %vm1652 = vmor %vm1650, %vm1651
        %v1653 = vsel %vm1652, %v1645, %v1649
        %v1654 = vand.u32 2147483647, %v1469
        %vm1655 = vcmp.eq.f32.partialorder %v1654, 8.507059e+37
        %v1656 = vand.u32 %v1469, 2147483648
        %v1657 = vor.u32 1.1754944e-38, %v1656
        %v1658 = vsel %vm1655, %v1657, %v1653
        %v1659 = vmul.f32 1.0, %v1658
        %v1660 = vrcp.pop %v1470
        %v1661 = vmul.f32 %v1470, %v1660
        %v1662 = vsub.f32 1.0, %v1661
        %v1663 = vmul.f32 %v1660, %v1662
        %v1664 = vadd.f32 %v1660, %v1663
        %vm1665 = vweird.f32 %v1470
        %vm1666 = vweird.f32 %v1660
        %vm1667 = vmor %vm1665, %vm1666
        %v1668 = vsel %vm1667, %v1660, %v1664
        %v1669 = vand.u32 2147483647, %v1470
        %vm1670 = vcmp.eq.f32.partialorder %v1669, 8.507059e+37
        %v1671 = vand.u32 %v1470, 2147483648
        %v1672 = vor.u32 1.1754944e-38, %v1671
        %v1673 = vsel %vm1670, %v1672, %v1668
        %v1674 = vmul.f32 1.0, %v1673
        %v1675 = vrcp.pop %v1471
        %v1676 = vmul.f32 %v1471, %v1675
        %v1677 = vsub.f32 1.0, %v1676
        %v1678 = vmul.f32 %v1675, %v1677
        %v1679 = vadd.f32 %v1675, %v1678
        %vm1680 = vweird.f32 %v1471
        %vm1681 = vweird.f32 %v1675
        %vm1682 = vmor %vm1680, %vm1681
        %v1683 = vsel %vm1682, %v1675, %v1679
        %v1684 = vand.u32 2147483647, %v1471
        %vm1685 = vcmp.eq.f32.partialorder %v1684, 8.507059e+37
        %v1686 = vand.u32 %v1471, 2147483648
        %v1687 = vor.u32 1.1754944e-38, %v1686
        %v1688 = vsel %vm1685, %v1687, %v1683
        %v1689 = vmul.f32 1.0, %v1688
        %v1690 = vrcp.pop %v1472
        %v1691 = vmul.f32 %v1472, %v1690
        %v1692 = vsub.f32 1.0, %v1691
        %v1693 = vmul.f32 %v1690, %v1692
        %v1694 = vadd.f32 %v1690, %v1693
        %vm1695 = vweird.f32 %v1472
        %vm1696 = vweird.f32 %v1690
        %vm1697 = vmor %vm1695, %vm1696
        %v1698 = vsel %vm1697, %v1690, %v1694
        %v1699 = vand.u32 2147483647, %v1472
        %vm1700 = vcmp.eq.f32.partialorder %v1699, 8.507059e+37
        %v1701 = vand.u32 %v1472, 2147483648
        %v1702 = vor.u32 1.1754944e-38, %v1701
        %v1703 = vsel %vm1700, %v1702, %v1698
        %v1704 = vmul.f32 1.0, %v1703
        %v1705 = vrcp.pop %v1473
        %v1706 = vmul.f32 %v1473, %v1705
        %v1707 = vsub.f32 1.0, %v1706
        %v1708 = vmul.f32 %v1705, %v1707
        %v1709 = vadd.f32 %v1705, %v1708
        %vm1710 = vweird.f32 %v1473
        %vm1711 = vweird.f32 %v1705
        %vm1712 = vmor %vm1710, %vm1711
        %v1713 = vsel %vm1712, %v1705, %v1709
        %v1714 = vand.u32 2147483647, %v1473
        %vm1715 = vcmp.eq.f32.partialorder %v1714, 8.507059e+37
        %v1716 = vand.u32 %v1473, 2147483648
        %v1717 = vor.u32 1.1754944e-38, %v1716
        %v1718 = vsel %vm1715, %v1717, %v1713
        %v1719 = vmul.f32 1.0, %v1718
        %v1720 = vrcp.pop %v1474
        %v1721 = vmul.f32 %v1474, %v1720
        %v1722 = vsub.f32 1.0, %v1721
        %v1723 = vmul.f32 %v1720, %v1722
        %v1724 = vadd.f32 %v1720, %v1723
        %vm1725 = vweird.f32 %v1474
        %vm1726 = vweird.f32 %v1720
        %vm1727 = vmor %vm1725, %vm1726
        %v1728 = vsel %vm1727, %v1720, %v1724
        %v1729 = vand.u32 2147483647, %v1474
        %vm1730 = vcmp.eq.f32.partialorder %v1729, 8.507059e+37
        %v1731 = vand.u32 %v1474, 2147483648
        %v1732 = vor.u32 1.1754944e-38, %v1731
        %v1733 = vsel %vm1730, %v1732, %v1728
        %v1734 = vmul.f32 1.0, %v1733
        %v1735 = vrcp.pop %v1475
        %v1736 = vmul.f32 %v1475, %v1735
        %v1737 = vsub.f32 1.0, %v1736
        %v1738 = vmul.f32 %v1735, %v1737
        %v1739 = vadd.f32 %v1735, %v1738
        %vm1740 = vweird.f32 %v1475
        %vm1741 = vweird.f32 %v1735
        %vm1742 = vmor %vm1740, %vm1741
        %v1743 = vsel %vm1742, %v1735, %v1739
        %v1744 = vand.u32 2147483647, %v1475
        %vm1745 = vcmp.eq.f32.partialorder %v1744, 8.507059e+37
        %v1746 = vand.u32 %v1475, 2147483648
        %v1747 = vor.u32 1.1754944e-38, %v1746
        %v1748 = vsel %vm1745, %v1747, %v1743
        %v1749 = vmul.f32 1.0, %v1748
        %v1750 = vrcp.pop %v1476
        %v1751 = vmul.f32 %v1476, %v1750
        %v1752 = vsub.f32 1.0, %v1751
        %v1753 = vmul.f32 %v1750, %v1752
        %v1754 = vadd.f32 %v1750, %v1753
        %vm1755 = vweird.f32 %v1476
        %vm1756 = vweird.f32 %v1750
        %vm1757 = vmor %vm1755, %vm1756
        %v1758 = vsel %vm1757, %v1750, %v1754
        %v1759 = vand.u32 2147483647, %v1476
        %vm1760 = vcmp.eq.f32.partialorder %v1759, 8.507059e+37
        %v1761 = vand.u32 %v1476, 2147483648
        %v1762 = vor.u32 1.1754944e-38, %v1761
        %v1763 = vsel %vm1760, %v1762, %v1758
        %v1764 = vmul.f32 1.0, %v1763
        %v1765 = vrcp.pop %v1477
        %v1766 = vmul.f32 %v1477, %v1765
        %v1767 = vsub.f32 1.0, %v1766
        %v1768 = vmul.f32 %v1765, %v1767
        %v1769 = vadd.f32 %v1765, %v1768
        %vm1770 = vweird.f32 %v1477
        %vm1771 = vweird.f32 %v1765
        %vm1772 = vmor %vm1770, %vm1771
        %v1773 = vsel %vm1772, %v1765, %v1769
        %v1774 = vand.u32 2147483647, %v1477
        %vm1775 = vcmp.eq.f32.partialorder %v1774, 8.507059e+37
        %v1776 = vand.u32 %v1477, 2147483648
        %v1777 = vor.u32 1.1754944e-38, %v1776
        %v1778 = vsel %vm1775, %v1777, %v1773
        %v1779 = vmul.f32 1.0, %v1778
        %v1780 = vrcp.pop %v1478
        %v1781 = vmul.f32 %v1478, %v1780
        %v1782 = vsub.f32 1.0, %v1781
        %v1783 = vmul.f32 %v1780, %v1782
        %v1784 = vadd.f32 %v1780, %v1783
        %vm1785 = vweird.f32 %v1478
        %vm1786 = vweird.f32 %v1780
        %vm1787 = vmor %vm1785, %vm1786
        %v1788 = vsel %vm1787, %v1780, %v1784
        %v1789 = vand.u32 2147483647, %v1478
        %vm1790 = vcmp.eq.f32.partialorder %v1789, 8.507059e+37
        %v1791 = vand.u32 %v1478, 2147483648
        %v1792 = vor.u32 1.1754944e-38, %v1791
        %v1793 = vsel %vm1790, %v1792, %v1788
        %v1794 = vmul.f32 1.0, %v1793
        %v1795 = vrcp.pop %v1479
        %v1796 = vmul.f32 %v1479, %v1795
        %v1797 = vsub.f32 1.0, %v1796
        %v1798 = vmul.f32 %v1795, %v1797
        %v1799 = vadd.f32 %v1795, %v1798
        %vm1800 = vweird.f32 %v1479
        %vm1801 = vweird.f32 %v1795
        %vm1802 = vmor %vm1800, %vm1801
        %v1803 = vsel %vm1802, %v1795, %v1799
        %v1804 = vand.u32 2147483647, %v1479
        %vm1805 = vcmp.eq.f32.partialorder %v1804, 8.507059e+37
        %v1806 = vand.u32 %v1479, 2147483648
        %v1807 = vor.u32 1.1754944e-38, %v1806
        %v1808 = vsel %vm1805, %v1807, %v1803
        %v1809 = vmul.f32 1.0, %v1808
        %v1810 = vrcp.pop %v1480
        %v1811 = vmul.f32 %v1480, %v1810
        %v1812 = vsub.f32 1.0, %v1811
        %v1813 = vmul.f32 %v1810, %v1812
        %v1814 = vadd.f32 %v1810, %v1813
        %vm1815 = vweird.f32 %v1480
        %vm1816 = vweird.f32 %v1810
        %vm1817 = vmor %vm1815, %vm1816
        %v1818 = vsel %vm1817, %v1810, %v1814
        %v1819 = vand.u32 2147483647, %v1480
        %vm1820 = vcmp.eq.f32.partialorder %v1819, 8.507059e+37
        %v1821 = vand.u32 %v1480, 2147483648
        %v1822 = vor.u32 1.1754944e-38, %v1821
        %v1823 = vsel %vm1820, %v1822, %v1818
        %v1824 = vmul.f32 1.0, %v1823
        %v1825 = vrcp.pop %v1481
        %v1826 = vmul.f32 %v1481, %v1825
        %v1827 = vsub.f32 1.0, %v1826
        %v1828 = vmul.f32 %v1825, %v1827
        %v1829 = vadd.f32 %v1825, %v1828
        %vm1830 = vweird.f32 %v1481
        %vm1831 = vweird.f32 %v1825
        %vm1832 = vmor %vm1830, %vm1831
        %v1833 = vsel %vm1832, %v1825, %v1829
        %v1834 = vand.u32 2147483647, %v1481
        %vm1835 = vcmp.eq.f32.partialorder %v1834, 8.507059e+37
        %v1836 = vand.u32 %v1481, 2147483648
        %v1837 = vor.u32 1.1754944e-38, %v1836
        %v1838 = vsel %vm1835, %v1837, %v1833
        %v1839 = vmul.f32 1.0, %v1838
        %v1840 = vrcp.pop %v1482
        %v1841 = vmul.f32 %v1482, %v1840
        %v1842 = vsub.f32 1.0, %v1841
        %v1843 = vmul.f32 %v1840, %v1842
        %v1844 = vadd.f32 %v1840, %v1843
        %vm1845 = vweird.f32 %v1482
        %vm1846 = vweird.f32 %v1840
        %vm1847 = vmor %vm1845, %vm1846
        %v1848 = vsel %vm1847, %v1840, %v1844
        %v1849 = vand.u32 2147483647, %v1482
        %vm1850 = vcmp.eq.f32.partialorder %v1849, 8.507059e+37
        %v1851 = vand.u32 %v1482, 2147483648
        %v1852 = vor.u32 1.1754944e-38, %v1851
        %v1853 = vsel %vm1850, %v1852, %v1848
        %v1854 = vmul.f32 1.0, %v1853
        %v1855 = vrcp.pop %v1483
        %v1856 = vmul.f32 %v1483, %v1855
        %v1857 = vsub.f32 1.0, %v1856
        %v1858 = vmul.f32 %v1855, %v1857
        %v1859 = vadd.f32 %v1855, %v1858
        %vm1860 = vweird.f32 %v1483
        %vm1861 = vweird.f32 %v1855
        %vm1862 = vmor %vm1860, %vm1861
        %v1863 = vsel %vm1862, %v1855, %v1859
        %v1864 = vand.u32 2147483647, %v1483
        %vm1865 = vcmp.eq.f32.partialorder %v1864, 8.507059e+37
        %v1866 = vand.u32 %v1483, 2147483648
        %v1867 = vor.u32 1.1754944e-38, %v1866
        %v1868 = vsel %vm1865, %v1867, %v1863
        %v1869 = vmul.f32 1.0, %v1868
        %v1870 = vrcp.pop %v1484
        %v1871 = vmul.f32 %v1484, %v1870
        %v1872 = vsub.f32 1.0, %v1871
        %v1873 = vmul.f32 %v1870, %v1872
        %v1874 = vadd.f32 %v1870, %v1873
        %vm1875 = vweird.f32 %v1484
        %vm1876 = vweird.f32 %v1870
        %vm1877 = vmor %vm1875, %vm1876
        %v1878 = vsel %vm1877, %v1870, %v1874
        %v1879 = vand.u32 2147483647, %v1484
        %vm1880 = vcmp.eq.f32.partialorder %v1879, 8.507059e+37
        %v1881 = vand.u32 %v1484, 2147483648
        %v1882 = vor.u32 1.1754944e-38, %v1881
        %v1883 = vsel %vm1880, %v1882, %v1878
        %v1884 = vmul.f32 1.0, %v1883
        %v1885 = vrcp.pop %v1485
        %v1886 = vmul.f32 %v1485, %v1885
        %v1887 = vsub.f32 1.0, %v1886
        %v1888 = vmul.f32 %v1885, %v1887
        %v1889 = vadd.f32 %v1885, %v1888
        %vm1890 = vweird.f32 %v1485
        %vm1891 = vweird.f32 %v1885
        %vm1892 = vmor %vm1890, %vm1891
        %v1893 = vsel %vm1892, %v1885, %v1889
        %v1894 = vand.u32 2147483647, %v1485
        %vm1895 = vcmp.eq.f32.partialorder %v1894, 8.507059e+37
        %v1896 = vand.u32 %v1485, 2147483648
        %v1897 = vor.u32 1.1754944e-38, %v1896
        %v1898 = vsel %vm1895, %v1897, %v1893
        %v1899 = vmul.f32 1.0, %v1898
        %v1900 = vrcp.pop %v1486
        %v1901 = vmul.f32 %v1486, %v1900
        %v1902 = vsub.f32 1.0, %v1901
        %v1903 = vmul.f32 %v1900, %v1902
        %v1904 = vadd.f32 %v1900, %v1903
        %vm1905 = vweird.f32 %v1486
        %vm1906 = vweird.f32 %v1900
        %vm1907 = vmor %vm1905, %vm1906
        %v1908 = vsel %vm1907, %v1900, %v1904
        %v1909 = vand.u32 2147483647, %v1486
        %vm1910 = vcmp.eq.f32.partialorder %v1909, 8.507059e+37
        %v1911 = vand.u32 %v1486, 2147483648
        %v1912 = vor.u32 1.1754944e-38, %v1911
        %v1913 = vsel %vm1910, %v1912, %v1908
        %v1914 = vmul.f32 1.0, %v1913
        %v1915 = vrcp.pop %v1487
        %v1916 = vmul.f32 %v1487, %v1915
        %v1917 = vsub.f32 1.0, %v1916
        %v1918 = vmul.f32 %v1915, %v1917
        %v1919 = vadd.f32 %v1915, %v1918
        %vm1920 = vweird.f32 %v1487
        %vm1921 = vweird.f32 %v1915
        %vm1922 = vmor %vm1920, %vm1921
        %v1923 = vsel %vm1922, %v1915, %v1919
        %v1924 = vand.u32 2147483647, %v1487
        %vm1925 = vcmp.eq.f32.partialorder %v1924, 8.507059e+37
        %v1926 = vand.u32 %v1487, 2147483648
        %v1927 = vor.u32 1.1754944e-38, %v1926
        %v1928 = vsel %vm1925, %v1927, %v1923
        %v1929 = vmul.f32 1.0, %v1928
        %v1930 = vrcp.pop %v1488
        %v1931 = vmul.f32 %v1488, %v1930
        %v1932 = vsub.f32 1.0, %v1931
        %v1933 = vmul.f32 %v1930, %v1932
        %v1934 = vadd.f32 %v1930, %v1933
        %vm1935 = vweird.f32 %v1488
        %vm1936 = vweird.f32 %v1930
        %vm1937 = vmor %vm1935, %vm1936
        %v1938 = vsel %vm1937, %v1930, %v1934
        %v1939 = vand.u32 2147483647, %v1488
        %vm1940 = vcmp.eq.f32.partialorder %v1939, 8.507059e+37
        %v1941 = vand.u32 %v1488, 2147483648
        %v1942 = vor.u32 1.1754944e-38, %v1941
        %v1943 = vsel %vm1940, %v1942, %v1938
        %v1944 = vmul.f32 1.0, %v1943
        %v1945 = vrcp.pop %v1489
        %v1946 = vmul.f32 %v1489, %v1945
        %v1947 = vsub.f32 1.0, %v1946
        %v1948 = vmul.f32 %v1945, %v1947
        %v1949 = vadd.f32 %v1945, %v1948
        %vm1950 = vweird.f32 %v1489
        %vm1951 = vweird.f32 %v1945
        %vm1952 = vmor %vm1950, %vm1951
        %v1953 = vsel %vm1952, %v1945, %v1949
        %v1954 = vand.u32 2147483647, %v1489
        %vm1955 = vcmp.eq.f32.partialorder %v1954, 8.507059e+37
        %v1956 = vand.u32 %v1489, 2147483648
        %v1957 = vor.u32 1.1754944e-38, %v1956
        %v1958 = vsel %vm1955, %v1957, %v1953
        %v1959 = vmul.f32 1.0, %v1958
        %v1960 = vrcp.pop %v1490
        %v1961 = vmul.f32 %v1490, %v1960
        %v1962 = vsub.f32 1.0, %v1961
        %v1963 = vmul.f32 %v1960, %v1962
        %v1964 = vadd.f32 %v1960, %v1963
        %vm1965 = vweird.f32 %v1490
        %vm1966 = vweird.f32 %v1960
        %vm1967 = vmor %vm1965, %vm1966
        %v1968 = vsel %vm1967, %v1960, %v1964
        %v1969 = vand.u32 2147483647, %v1490
        %vm1970 = vcmp.eq.f32.partialorder %v1969, 8.507059e+37
        %v1971 = vand.u32 %v1490, 2147483648
        %v1972 = vor.u32 1.1754944e-38, %v1971
        %v1973 = vsel %vm1970, %v1972, %v1968
        %v1974 = vmul.f32 1.0, %v1973
        %v1975 = vrcp.pop %v1491
        %v1976 = vmul.f32 %v1491, %v1975
        %v1977 = vsub.f32 1.0, %v1976
        %v1978 = vmul.f32 %v1975, %v1977
        %v1979 = vadd.f32 %v1975, %v1978
        %vm1980 = vweird.f32 %v1491
        %vm1981 = vweird.f32 %v1975
        %vm1982 = vmor %vm1980, %vm1981
        %v1983 = vsel %vm1982, %v1975, %v1979
        %v1984 = vand.u32 2147483647, %v1491
        %vm1985 = vcmp.eq.f32.partialorder %v1984, 8.507059e+37
        %v1986 = vand.u32 %v1491, 2147483648
        %v1987 = vor.u32 1.1754944e-38, %v1986
        %v1988 = vsel %vm1985, %v1987, %v1983
        %v1989 = vmul.f32 1.0, %v1988
        %v1990 = vrcp.pop %v1492
        %v1991 = vmul.f32 %v1492, %v1990
        %v1992 = vsub.f32 1.0, %v1991
        %v1993 = vmul.f32 %v1990, %v1992
        %v1994 = vadd.f32 %v1990, %v1993
        %vm1995 = vweird.f32 %v1492
        %vm1996 = vweird.f32 %v1990
        %vm1997 = vmor %vm1995, %vm1996
        %v1998 = vsel %vm1997, %v1990, %v1994
        %v1999 = vand.u32 2147483647, %v1492
        %vm2000 = vcmp.eq.f32.partialorder %v1999, 8.507059e+37
        %v2001 = vand.u32 %v1492, 2147483648
        %v2002 = vor.u32 1.1754944e-38, %v2001
        %v2003 = vsel %vm2000, %v2002, %v1998
        %v2004 = vmul.f32 1.0, %v2003
        %v2005 = vrcp.pop %v1493
        %v2006 = vmul.f32 %v1493, %v2005
        %v2007 = vsub.f32 1.0, %v2006
        %v2008 = vmul.f32 %v2005, %v2007
        %v2009 = vadd.f32 %v2005, %v2008
        %vm2010 = vweird.f32 %v1493
        %vm2011 = vweird.f32 %v2005
        %vm2012 = vmor %vm2010, %vm2011
        %v2013 = vsel %vm2012, %v2005, %v2009
        %v2014 = vand.u32 2147483647, %v1493
        %vm2015 = vcmp.eq.f32.partialorder %v2014, 8.507059e+37
        %v2016 = vand.u32 %v1493, 2147483648
        %v2017 = vor.u32 1.1754944e-38, %v2016
        %v2018 = vsel %vm2015, %v2017, %v2013
        %v2019 = vmul.f32 1.0, %v2018
        %v2020 = vrcp.pop %v1494
        %v2021 = vmul.f32 %v1494, %v2020
        %v2022 = vsub.f32 1.0, %v2021
        %v2023 = vmul.f32 %v2020, %v2022
        %v2024 = vadd.f32 %v2020, %v2023
        %vm2025 = vweird.f32 %v1494
        %vm2026 = vweird.f32 %v2020
        %vm2027 = vmor %vm2025, %vm2026
        %v2028 = vsel %vm2027, %v2020, %v2024
        %v2029 = vand.u32 2147483647, %v1494
        %vm2030 = vcmp.eq.f32.partialorder %v2029, 8.507059e+37
        %v2031 = vand.u32 %v1494, 2147483648
        %v2032 = vor.u32 1.1754944e-38, %v2031
        %v2033 = vsel %vm2030, %v2032, %v2028
        %v2034 = vmul.f32 1.0, %v2033
        %v2035 = vrcp.pop %v1495
        %v2036 = vmul.f32 %v1495, %v2035
        %v2037 = vsub.f32 1.0, %v2036
        %v2038 = vmul.f32 %v2035, %v2037
        %v2039 = vadd.f32 %v2035, %v2038
        %vm2040 = vweird.f32 %v1495
        %vm2041 = vweird.f32 %v2035
        %vm2042 = vmor %vm2040, %vm2041
        %v2043 = vsel %vm2042, %v2035, %v2039
        %v2044 = vand.u32 2147483647, %v1495
        %vm2045 = vcmp.eq.f32.partialorder %v2044, 8.507059e+37
        %v2046 = vand.u32 %v1495, 2147483648
        %v2047 = vor.u32 1.1754944e-38, %v2046
        %v2048 = vsel %vm2045, %v2047, %v2043
        %v2049 = vmul.f32 1.0, %v2048
        %v2050 = vrcp.pop %v1496
        %v2051 = vmul.f32 %v1496, %v2050
        %v2052 = vsub.f32 1.0, %v2051
        %v2053 = vmul.f32 %v2050, %v2052
        %v2054 = vadd.f32 %v2050, %v2053
        %vm2055 = vweird.f32 %v1496
        %vm2056 = vweird.f32 %v2050
        %vm2057 = vmor %vm2055, %vm2056
        %v2058 = vsel %vm2057, %v2050, %v2054
        %v2059 = vand.u32 2147483647, %v1496
        %vm2060 = vcmp.eq.f32.partialorder %v2059, 8.507059e+37
        %v2061 = vand.u32 %v1496, 2147483648
        %v2062 = vor.u32 1.1754944e-38, %v2061
        %v2063 = vsel %vm2060, %v2062, %v2058
        %v2064 = vmul.f32 1.0, %v2063
        %v2065 = vrcp.pop %v1497
        %v2066 = vmul.f32 %v1497, %v2065
        %v2067 = vsub.f32 1.0, %v2066
        %v2068 = vmul.f32 %v2065, %v2067
        %v2069 = vadd.f32 %v2065, %v2068
        %vm2070 = vweird.f32 %v1497
        %vm2071 = vweird.f32 %v2065
        %vm2072 = vmor %vm2070, %vm2071
        %v2073 = vsel %vm2072, %v2065, %v2069
        %v2074 = vand.u32 2147483647, %v1497
        %vm2075 = vcmp.eq.f32.partialorder %v2074, 8.507059e+37
        %v2076 = vand.u32 %v1497, 2147483648
        %v2077 = vor.u32 1.1754944e-38, %v2076
        %v2078 = vsel %vm2075, %v2077, %v2073
        %v2079 = vmul.f32 1.0, %v2078
        %v2080 = vrcp.pop %v1498
        %v2081 = vmul.f32 %v1498, %v2080
        %v2082 = vsub.f32 1.0, %v2081
        %v2083 = vmul.f32 %v2080, %v2082
        %v2084 = vadd.f32 %v2080, %v2083
        %vm2085 = vweird.f32 %v1498
        %vm2086 = vweird.f32 %v2080
        %vm2087 = vmor %vm2085, %vm2086
        %v2088 = vsel %vm2087, %v2080, %v2084
        %v2089 = vand.u32 2147483647, %v1498
        %vm2090 = vcmp.eq.f32.partialorder %v2089, 8.507059e+37
        %v2091 = vand.u32 %v1498, 2147483648
        %v2092 = vor.u32 1.1754944e-38, %v2091
        %v2093 = vsel %vm2090, %v2092, %v2088
        %v2094 = vmul.f32 1.0, %v2093
        %v2095 = vrcp.pop %v1499
        %v2096 = vmul.f32 %v1499, %v2095
        %v2097 = vsub.f32 1.0, %v2096
        %v2098 = vmul.f32 %v2095, %v2097
        %v2099 = vadd.f32 %v2095, %v2098
        %vm2100 = vweird.f32 %v1499
        %vm2101 = vweird.f32 %v2095
        %vm2102 = vmor %vm2100, %vm2101
        %v2103 = vsel %vm2102, %v2095, %v2099
        %v2104 = vand.u32 2147483647, %v1499
        %vm2105 = vcmp.eq.f32.partialorder %v2104, 8.507059e+37
        %v2106 = vand.u32 %v1499, 2147483648
        %v2107 = vor.u32 1.1754944e-38, %v2106
        %v2108 = vsel %vm2105, %v2107, %v2103
        %v2109 = vmul.f32 1.0, %v2108
        %v2110 = vrcp.pop %v1500
        %v2111 = vmul.f32 %v1500, %v2110
        %v2112 = vsub.f32 1.0, %v2111
        %v2113 = vmul.f32 %v2110, %v2112
        %v2114 = vadd.f32 %v2110, %v2113
        %vm2115 = vweird.f32 %v1500
        %vm2116 = vweird.f32 %v2110
        %vm2117 = vmor %vm2115, %vm2116
        %v2118 = vsel %vm2117, %v2110, %v2114
        %v2119 = vand.u32 2147483647, %v1500
        %vm2120 = vcmp.eq.f32.partialorder %v2119, 8.507059e+37
        %v2121 = vand.u32 %v1500, 2147483648
        %v2122 = vor.u32 1.1754944e-38, %v2121
        %v2123 = vsel %vm2120, %v2122, %v2118
        %v2124 = vmul.f32 1.0, %v2123
        %v2125 = vrcp.pop %v1501
        %v2126 = vmul.f32 %v1501, %v2125
        %v2127 = vsub.f32 1.0, %v2126
        %v2128 = vmul.f32 %v2125, %v2127
        %v2129 = vadd.f32 %v2125, %v2128
        %vm2130 = vweird.f32 %v1501
        %vm2131 = vweird.f32 %v2125
        %vm2132 = vmor %vm2130, %vm2131
        %v2133 = vsel %vm2132, %v2125, %v2129
        %v2134 = vand.u32 2147483647, %v1501
        %vm2135 = vcmp.eq.f32.partialorder %v2134, 8.507059e+37
        %v2136 = vand.u32 %v1501, 2147483648
        %v2137 = vor.u32 1.1754944e-38, %v2136
        %v2138 = vsel %vm2135, %v2137, %v2133
        %v2139 = vmul.f32 1.0, %v2138
        %v2140 = vrcp.pop %v1502
        %v2141 = vmul.f32 %v1502, %v2140
        %v2142 = vsub.f32 1.0, %v2141
        %v2143 = vmul.f32 %v2140, %v2142
        %v2144 = vadd.f32 %v2140, %v2143
        %vm2145 = vweird.f32 %v1502
        %vm2146 = vweird.f32 %v2140
        %vm2147 = vmor %vm2145, %vm2146
        %v2148 = vsel %vm2147, %v2140, %v2144
        %v2149 = vand.u32 2147483647, %v1502
        %vm2150 = vcmp.eq.f32.partialorder %v2149, 8.507059e+37
        %v2151 = vand.u32 %v1502, 2147483648
        %v2152 = vor.u32 1.1754944e-38, %v2151
        %v2153 = vsel %vm2150, %v2152, %v2148
        %v2154 = vmul.f32 1.0, %v2153
        %v2155 = vrcp.pop %v1503
        %v2156 = vmul.f32 %v1503, %v2155
        %v2157 = vsub.f32 1.0, %v2156
        %v2158 = vmul.f32 %v2155, %v2157
        %v2159 = vadd.f32 %v2155, %v2158
        %vm2160 = vweird.f32 %v1503
        %vm2161 = vweird.f32 %v2155
        %vm2162 = vmor %vm2160, %vm2161
        %v2163 = vsel %vm2162, %v2155, %v2159
        %v2164 = vand.u32 2147483647, %v1503
        %vm2165 = vcmp.eq.f32.partialorder %v2164, 8.507059e+37
        %v2166 = vand.u32 %v1503, 2147483648
        %v2167 = vor.u32 1.1754944e-38, %v2166
        %v2168 = vsel %vm2165, %v2167, %v2163
        %v2169 = vmul.f32 1.0, %v2168
        %v2170 = vrcp.pop %v1504
        %v2171 = vmul.f32 %v1504, %v2170
        %v2172 = vsub.f32 1.0, %v2171
        %v2173 = vmul.f32 %v2170, %v2172
        %v2174 = vadd.f32 %v2170, %v2173
        %vm2175 = vweird.f32 %v1504
        %vm2176 = vweird.f32 %v2170
        %vm2177 = vmor %vm2175, %vm2176
        %v2178 = vsel %vm2177, %v2170, %v2174
        %v2179 = vand.u32 2147483647, %v1504
        %vm2180 = vcmp.eq.f32.partialorder %v2179, 8.507059e+37
        %v2181 = vand.u32 %v1504, 2147483648
        %v2182 = vor.u32 1.1754944e-38, %v2181
        %v2183 = vsel %vm2180, %v2182, %v2178
        %v2184 = vmul.f32 1.0, %v2183
        %v2185 = vrcp.pop %v1505
        %v2186 = vmul.f32 %v1505, %v2185
        %v2187 = vsub.f32 1.0, %v2186
        %v2188 = vmul.f32 %v2185, %v2187
        %v2189 = vadd.f32 %v2185, %v2188
        %vm2190 = vweird.f32 %v1505
        %vm2191 = vweird.f32 %v2185
        %vm2192 = vmor %vm2190, %vm2191
        %v2193 = vsel %vm2192, %v2185, %v2189
        %v2194 = vand.u32 2147483647, %v1505
        %vm2195 = vcmp.eq.f32.partialorder %v2194, 8.507059e+37
        %v2196 = vand.u32 %v1505, 2147483648
        %v2197 = vor.u32 1.1754944e-38, %v2196
        %v2198 = vsel %vm2195, %v2197, %v2193
        %v2199 = vmul.f32 1.0, %v2198
        %v2200 = vrcp.pop %v1506
        %v2201 = vmul.f32 %v1506, %v2200
        %v2202 = vsub.f32 1.0, %v2201
        %v2203 = vmul.f32 %v2200, %v2202
        %v2204 = vadd.f32 %v2200, %v2203
        %vm2205 = vweird.f32 %v1506
        %vm2206 = vweird.f32 %v2200
        %vm2207 = vmor %vm2205, %vm2206
        %v2208 = vsel %vm2207, %v2200, %v2204
        %v2209 = vand.u32 2147483647, %v1506
        %vm2210 = vcmp.eq.f32.partialorder %v2209, 8.507059e+37
        %v2211 = vand.u32 %v1506, 2147483648
        %v2212 = vor.u32 1.1754944e-38, %v2211
        %v2213 = vsel %vm2210, %v2212, %v2208
        %v2214 = vmul.f32 1.0, %v2213
        %v2215 = vrcp.pop %v1507
        %v2216 = vmul.f32 %v1507, %v2215
        %v2217 = vsub.f32 1.0, %v2216
        %v2218 = vmul.f32 %v2215, %v2217
        %v2219 = vadd.f32 %v2215, %v2218
        %vm2220 = vweird.f32 %v1507
        %vm2221 = vweird.f32 %v2215
        %vm2222 = vmor %vm2220, %vm2221
        %v2223 = vsel %vm2222, %v2215, %v2219
        %v2224 = vand.u32 2147483647, %v1507
        %vm2225 = vcmp.eq.f32.partialorder %v2224, 8.507059e+37
        %v2226 = vand.u32 %v1507, 2147483648
        %v2227 = vor.u32 1.1754944e-38, %v2226
        %v2228 = vsel %vm2225, %v2227, %v2223
        %v2229 = vmul.f32 1.0, %v2228
        %v2230 = vrcp.pop %v1508
        %v2231 = vmul.f32 %v1508, %v2230
        %v2232 = vsub.f32 1.0, %v2231
        %v2233 = vmul.f32 %v2230, %v2232
        %v2234 = vadd.f32 %v2230, %v2233
        %vm2235 = vweird.f32 %v1508
        %vm2236 = vweird.f32 %v2230
        %vm2237 = vmor %vm2235, %vm2236
        %v2238 = vsel %vm2237, %v2230, %v2234
        %v2239 = vand.u32 2147483647, %v1508
        %vm2240 = vcmp.eq.f32.partialorder %v2239, 8.507059e+37
        %v2241 = vand.u32 %v1508, 2147483648
        %v2242 = vor.u32 1.1754944e-38, %v2241
        %v2243 = vsel %vm2240, %v2242, %v2238
        %v2244 = vmul.f32 1.0, %v2243
        %v2245 = vrcp.pop %v1509
        %v2246 = vmul.f32 %v1509, %v2245
        %v2247 = vsub.f32 1.0, %v2246
        %v2248 = vmul.f32 %v2245, %v2247
        %v2249 = vadd.f32 %v2245, %v2248
        %vm2250 = vweird.f32 %v1509
        %vm2251 = vweird.f32 %v2245
        %vm2252 = vmor %vm2250, %vm2251
        %v2253 = vsel %vm2252, %v2245, %v2249
        %v2254 = vand.u32 2147483647, %v1509
        %vm2255 = vcmp.eq.f32.partialorder %v2254, 8.507059e+37
        %v2256 = vand.u32 %v1509, 2147483648
        %v2257 = vor.u32 1.1754944e-38, %v2256
        %v2258 = vsel %vm2255, %v2257, %v2253
        %v2259 = vmul.f32 1.0, %v2258
        %v2260 = vrcp.pop %v1510
        %v2261 = vmul.f32 %v1510, %v2260
        %v2262 = vsub.f32 1.0, %v2261
        %v2263 = vmul.f32 %v2260, %v2262
        %v2264 = vadd.f32 %v2260, %v2263
        %vm2265 = vweird.f32 %v1510
        %vm2266 = vweird.f32 %v2260
        %vm2267 = vmor %vm2265, %vm2266
        %v2268 = vsel %vm2267, %v2260, %v2264
        %v2269 = vand.u32 2147483647, %v1510
        %vm2270 = vcmp.eq.f32.partialorder %v2269, 8.507059e+37
        %v2271 = vand.u32 %v1510, 2147483648
        %v2272 = vor.u32 1.1754944e-38, %v2271
        %v2273 = vsel %vm2270, %v2272, %v2268
        %v2274 = vmul.f32 1.0, %v2273
        %v2275 = vrcp.pop %v1511
        %v2276 = vmul.f32 %v1511, %v2275
        %v2277 = vsub.f32 1.0, %v2276
        %v2278 = vmul.f32 %v2275, %v2277
        %v2279 = vadd.f32 %v2275, %v2278
        %vm2280 = vweird.f32 %v1511
        %vm2281 = vweird.f32 %v2275
        %vm2282 = vmor %vm2280, %vm2281
        %v2283 = vsel %vm2282, %v2275, %v2279
        %v2284 = vand.u32 2147483647, %v1511
        %vm2285 = vcmp.eq.f32.partialorder %v2284, 8.507059e+37
        %v2286 = vand.u32 %v1511, 2147483648
        %v2287 = vor.u32 1.1754944e-38, %v2286
        %v2288 = vsel %vm2285, %v2287, %v2283
        %v2289 = vmul.f32 1.0, %v2288
        %v2290 = vrcp.pop %v1512
        %v2291 = vmul.f32 %v1512, %v2290
        %v2292 = vsub.f32 1.0, %v2291
        %v2293 = vmul.f32 %v2290, %v2292
        %v2294 = vadd.f32 %v2290, %v2293
        %vm2295 = vweird.f32 %v1512
        %vm2296 = vweird.f32 %v2290
        %vm2297 = vmor %vm2295, %vm2296
        %v2298 = vsel %vm2297, %v2290, %v2294
        %v2299 = vand.u32 2147483647, %v1512
        %vm2300 = vcmp.eq.f32.partialorder %v2299, 8.507059e+37
        %v2301 = vand.u32 %v1512, 2147483648
        %v2302 = vor.u32 1.1754944e-38, %v2301
        %v2303 = vsel %vm2300, %v2302, %v2298
        %v2304 = vmul.f32 1.0, %v2303
        %v2305 = vrcp.pop %v1513
        %v2306 = vmul.f32 %v1513, %v2305
        %v2307 = vsub.f32 1.0, %v2306
        %v2308 = vmul.f32 %v2305, %v2307
        %v2309 = vadd.f32 %v2305, %v2308
        %vm2310 = vweird.f32 %v1513
        %vm2311 = vweird.f32 %v2305
        %vm2312 = vmor %vm2310, %vm2311
        %v2313 = vsel %vm2312, %v2305, %v2309
        %v2314 = vand.u32 2147483647, %v1513
        %vm2315 = vcmp.eq.f32.partialorder %v2314, 8.507059e+37
        %v2316 = vand.u32 %v1513, 2147483648
        %v2317 = vor.u32 1.1754944e-38, %v2316
        %v2318 = vsel %vm2315, %v2317, %v2313
        %v2319 = vmul.f32 1.0, %v2318
        %v2320 = vrcp.pop %v1514
        %v2321 = vmul.f32 %v1514, %v2320
        %v2322 = vsub.f32 1.0, %v2321
        %v2323 = vmul.f32 %v2320, %v2322
        %v2324 = vadd.f32 %v2320, %v2323
        %vm2325 = vweird.f32 %v1514
        %vm2326 = vweird.f32 %v2320
        %vm2327 = vmor %vm2325, %vm2326
        %v2328 = vsel %vm2327, %v2320, %v2324
        %v2329 = vand.u32 2147483647, %v1514
        %vm2330 = vcmp.eq.f32.partialorder %v2329, 8.507059e+37
        %v2331 = vand.u32 %v1514, 2147483648
        %v2332 = vor.u32 1.1754944e-38, %v2331
        %v2333 = vsel %vm2330, %v2332, %v2328
        %v2334 = vmul.f32 1.0, %v2333
        %v2335 = vrcp.pop %v1515
        %v2336 = vmul.f32 %v1515, %v2335
        %v2337 = vsub.f32 1.0, %v2336
        %v2338 = vmul.f32 %v2335, %v2337
        %v2339 = vadd.f32 %v2335, %v2338
        %vm2340 = vweird.f32 %v1515
        %vm2341 = vweird.f32 %v2335
        %vm2342 = vmor %vm2340, %vm2341
        %v2343 = vsel %vm2342, %v2335, %v2339
        %v2344 = vand.u32 2147483647, %v1515
        %vm2345 = vcmp.eq.f32.partialorder %v2344, 8.507059e+37
        %v2346 = vand.u32 %v1515, 2147483648
        %v2347 = vor.u32 1.1754944e-38, %v2346
        %v2348 = vsel %vm2345, %v2347, %v2343
        %v2349 = vmul.f32 1.0, %v2348
        %v2350 = vrcp.pop %v1516
        %v2351 = vmul.f32 %v1516, %v2350
        %v2352 = vsub.f32 1.0, %v2351
        %v2353 = vmul.f32 %v2350, %v2352
        %v2354 = vadd.f32 %v2350, %v2353
        %vm2355 = vweird.f32 %v1516
        %vm2356 = vweird.f32 %v2350
        %vm2357 = vmor %vm2355, %vm2356
        %v2358 = vsel %vm2357, %v2350, %v2354
        %v2359 = vand.u32 2147483647, %v1516
        %vm2360 = vcmp.eq.f32.partialorder %v2359, 8.507059e+37
        %v2361 = vand.u32 %v1516, 2147483648
        %v2362 = vor.u32 1.1754944e-38, %v2361
        %v2363 = vsel %vm2360, %v2362, %v2358
        %v2364 = vmul.f32 1.0, %v2363
        %v2365 = vrcp.pop %v1517
        %v2366 = vmul.f32 %v1517, %v2365
        %v2367 = vsub.f32 1.0, %v2366
        %v2368 = vmul.f32 %v2365, %v2367
        %v2369 = vadd.f32 %v2365, %v2368
        %vm2370 = vweird.f32 %v1517
        %vm2371 = vweird.f32 %v2365
        %vm2372 = vmor %vm2370, %vm2371
        %v2373 = vsel %vm2372, %v2365, %v2369
        %v2374 = vand.u32 2147483647, %v1517
        %vm2375 = vcmp.eq.f32.partialorder %v2374, 8.507059e+37
        %v2376 = vand.u32 %v1517, 2147483648
        %v2377 = vor.u32 1.1754944e-38, %v2376
        %v2378 = vsel %vm2375, %v2377, %v2373
        %v2379 = vmul.f32 1.0, %v2378
        %v2380 = vrcp.pop %v1518
        %v2381 = vmul.f32 %v1518, %v2380
        %v2382 = vsub.f32 1.0, %v2381
        %v2383 = vmul.f32 %v2380, %v2382
        %v2384 = vadd.f32 %v2380, %v2383
        %vm2385 = vweird.f32 %v1518
        %vm2386 = vweird.f32 %v2380
        %vm2387 = vmor %vm2385, %vm2386
        %v2388 = vsel %vm2387, %v2380, %v2384
        %v2389 = vand.u32 2147483647, %v1518
        %vm2390 = vcmp.eq.f32.partialorder %v2389, 8.507059e+37
        %v2391 = vand.u32 %v1518, 2147483648
        %v2392 = vor.u32 1.1754944e-38, %v2391
        %v2393 = vsel %vm2390, %v2392, %v2388
        %v2394 = vmul.f32 1.0, %v2393
        %v2395 = vrcp.pop %v1519
        %v2396 = vmul.f32 %v1519, %v2395
        %v2397 = vsub.f32 1.0, %v2396
        %v2398 = vmul.f32 %v2395, %v2397
        %v2399 = vadd.f32 %v2395, %v2398
        %vm2400 = vweird.f32 %v1519
        %vm2401 = vweird.f32 %v2395
        %vm2402 = vmor %vm2400, %vm2401
        %v2403 = vsel %vm2402, %v2395, %v2399
        %v2404 = vand.u32 2147483647, %v1519
        %vm2405 = vcmp.eq.f32.partialorder %v2404, 8.507059e+37
        %v2406 = vand.u32 %v1519, 2147483648
        %v2407 = vor.u32 1.1754944e-38, %v2406
        %v2408 = vsel %vm2405, %v2407, %v2403
        %v2409 = vmul.f32 1.0, %v2408
        %v2410 = vrcp.pop %v1520
        %v2411 = vmul.f32 %v1520, %v2410
        %v2412 = vsub.f32 1.0, %v2411
        %v2413 = vmul.f32 %v2410, %v2412
        %v2414 = vadd.f32 %v2410, %v2413
        %vm2415 = vweird.f32 %v1520
        %vm2416 = vweird.f32 %v2410
        %vm2417 = vmor %vm2415, %vm2416
        %v2418 = vsel %vm2417, %v2410, %v2414
        %v2419 = vand.u32 2147483647, %v1520
        %vm2420 = vcmp.eq.f32.partialorder %v2419, 8.507059e+37
        %v2421 = vand.u32 %v1520, 2147483648
        %v2422 = vor.u32 1.1754944e-38, %v2421
        %v2423 = vsel %vm2420, %v2422, %v2418
        %v2424 = vmul.f32 1.0, %v2423
        %v2425 = vrcp.pop %v1521
        %v2426 = vmul.f32 %v1521, %v2425
        %v2427 = vsub.f32 1.0, %v2426
        %v2428 = vmul.f32 %v2425, %v2427
        %v2429 = vadd.f32 %v2425, %v2428
        %vm2430 = vweird.f32 %v1521
        %vm2431 = vweird.f32 %v2425
        %vm2432 = vmor %vm2430, %vm2431
        %v2433 = vsel %vm2432, %v2425, %v2429
        %v2434 = vand.u32 2147483647, %v1521
        %vm2435 = vcmp.eq.f32.partialorder %v2434, 8.507059e+37
        %v2436 = vand.u32 %v1521, 2147483648
        %v2437 = vor.u32 1.1754944e-38, %v2436
        %v2438 = vsel %vm2435, %v2437, %v2433
        %v2439 = vmul.f32 1.0, %v2438
        %v2440 = vrcp.pop %v1522
        %v2441 = vmul.f32 %v1522, %v2440
        %v2442 = vsub.f32 1.0, %v2441
        %v2443 = vmul.f32 %v2440, %v2442
        %v2444 = vadd.f32 %v2440, %v2443
        %vm2445 = vweird.f32 %v1522
        %vm2446 = vweird.f32 %v2440
        %vm2447 = vmor %vm2445, %vm2446
        %v2448 = vsel %vm2447, %v2440, %v2444
        %v2449 = vand.u32 2147483647, %v1522
        %vm2450 = vcmp.eq.f32.partialorder %v2449, 8.507059e+37
        %v2451 = vand.u32 %v1522, 2147483648
        %v2452 = vor.u32 1.1754944e-38, %v2451
        %v2453 = vsel %vm2450, %v2452, %v2448
        %v2454 = vmul.f32 1.0, %v2453
        %v2455 = vrcp.pop %v1523
        %v2456 = vmul.f32 %v1523, %v2455
        %v2457 = vsub.f32 1.0, %v2456
        %v2458 = vmul.f32 %v2455, %v2457
        %v2459 = vadd.f32 %v2455, %v2458
        %vm2460 = vweird.f32 %v1523
        %vm2461 = vweird.f32 %v2455
        %vm2462 = vmor %vm2460, %vm2461
        %v2463 = vsel %vm2462, %v2455, %v2459
        %v2464 = vand.u32 2147483647, %v1523
        %vm2465 = vcmp.eq.f32.partialorder %v2464, 8.507059e+37
        %v2466 = vand.u32 %v1523, 2147483648
        %v2467 = vor.u32 1.1754944e-38, %v2466
        %v2468 = vsel %vm2465, %v2467, %v2463
        %v2469 = vmul.f32 1.0, %v2468
        %v2470 = vrcp.pop %v1524
        %v2471 = vmul.f32 %v1524, %v2470
        %v2472 = vsub.f32 1.0, %v2471
        %v2473 = vmul.f32 %v2470, %v2472
        %v2474 = vadd.f32 %v2470, %v2473
        %vm2475 = vweird.f32 %v1524
        %vm2476 = vweird.f32 %v2470
        %vm2477 = vmor %vm2475, %vm2476
        %v2478 = vsel %vm2477, %v2470, %v2474
        %v2479 = vand.u32 2147483647, %v1524
        %vm2480 = vcmp.eq.f32.partialorder %v2479, 8.507059e+37
        %v2481 = vand.u32 %v1524, 2147483648
        %v2482 = vor.u32 1.1754944e-38, %v2481
        %v2483 = vsel %vm2480, %v2482, %v2478
        %v2484 = vmul.f32 1.0, %v2483
        %2485 = vst [vmem:[%s317] sm:$0xff] %v1539
        %2486 = vst [vmem:[%s317 + $0x8] sm:$0xff] %v1554
        %2487 = vst [vmem:[%s317 + $0x10] sm:$0xff] %v1569
        %2488 = vst [vmem:[%s317 + $0x18] sm:$0xff] %v1584
        %2489 = vst [vmem:[%s317 + $0x20] sm:$0xff] %v1599
        %2490 = vst [vmem:[%s317 + $0x28] sm:$0xff] %v1614
        %2491 = vst [vmem:[%s317 + $0x30] sm:$0xff] %v1629
        %2492 = vst [vmem:[%s317 + $0x38] sm:$0xff] %v1644
        %2493 = vst [vmem:[%s317 + $0x40] sm:$0xff] %v1659
        %2494 = vst [vmem:[%s317 + $0x48] sm:$0xff] %v1674
        %2495 = vst [vmem:[%s317 + $0x50] sm:$0xff] %v1689
        %2496 = vst [vmem:[%s317 + $0x58] sm:$0xff] %v1704
        %2497 = vst [vmem:[%s317 + $0x60] sm:$0xff] %v1719
        %2498 = vst [vmem:[%s317 + $0x68] sm:$0xff] %v1734
        %2499 = vst [vmem:[%s317 + $0x70] sm:$0xff] %v1749
        %2500 = vst [vmem:[%s317 + $0x78] sm:$0xff] %v1764
        %2501 = vst [vmem:[%s317 + $0x80] sm:$0xff] %v1779
        %2502 = vst [vmem:[%s317 + $0x88] sm:$0xff] %v1794
        %2503 = vst [vmem:[%s317 + $0x90] sm:$0xff] %v1809
        %2504 = vst [vmem:[%s317 + $0x98] sm:$0xff] %v1824
        %2505 = vst [vmem:[%s317 + $0xa0] sm:$0xff] %v1839
        %2506 = vst [vmem:[%s317 + $0xa8] sm:$0xff] %v1854
        %2507 = vst [vmem:[%s317 + $0xb0] sm:$0xff] %v1869
        %2508 = vst [vmem:[%s317 + $0xb8] sm:$0xff] %v1884
        %2509 = vst [vmem:[%s317 + $0xc0] sm:$0xff] %v1899
        %2510 = vst [vmem:[%s317 + $0xc8] sm:$0xff] %v1914
        %2511 = vst [vmem:[%s317 + $0xd0] sm:$0xff] %v1929
        %2512 = vst [vmem:[%s317 + $0xd8] sm:$0xff] %v1944
        %2513 = vst [vmem:[%s317 + $0xe0] sm:$0xff] %v1959
        %2514 = vst [vmem:[%s317 + $0xe8] sm:$0xff] %v1974
        %2515 = vst [vmem:[%s317 + $0xf0] sm:$0xff] %v1989
        %2516 = vst [vmem:[%s317 + $0xf8] sm:$0xff] %v2004
        %2517 = vst [vmem:[%s317 + $0x100] sm:$0xff] %v2019
        %2518 = vst [vmem:[%s317 + $0x108] sm:$0xff] %v2034
        %2519 = vst [vmem:[%s317 + $0x110] sm:$0xff] %v2049
        %2520 = vst [vmem:[%s317 + $0x118] sm:$0xff] %v2064
        %2521 = vst [vmem:[%s317 + $0x120] sm:$0xff] %v2079
        %2522 = vst [vmem:[%s317 + $0x128] sm:$0xff] %v2094
        %2523 = vst [vmem:[%s317 + $0x130] sm:$0xff] %v2109
        %2524 = vst [vmem:[%s317 + $0x138] sm:$0xff] %v2124
        %2525 = vst [vmem:[%s317 + $0x140] sm:$0xff] %v2139
        %2526 = vst [vmem:[%s317 + $0x148] sm:$0xff] %v2154
        %2527 = vst [vmem:[%s317 + $0x150] sm:$0xff] %v2169
        %2528 = vst [vmem:[%s317 + $0x158] sm:$0xff] %v2184
        %2529 = vst [vmem:[%s317 + $0x160] sm:$0xff] %v2199
        %2530 = vst [vmem:[%s317 + $0x168] sm:$0xff] %v2214
        %2531 = vst [vmem:[%s317 + $0x170] sm:$0xff] %v2229
        %2532 = vst [vmem:[%s317 + $0x178] sm:$0xff] %v2244
        %2533 = vst [vmem:[%s317 + $0x180] sm:$0xff] %v2259
        %2534 = vst [vmem:[%s317 + $0x188] sm:$0xff] %v2274
        %2535 = vst [vmem:[%s317 + $0x190] sm:$0xff] %v2289
        %2536 = vst [vmem:[%s317 + $0x198] sm:$0xff] %v2304
        %2537 = vst [vmem:[%s317 + $0x1a0] sm:$0xff] %v2319
        %2538 = vst [vmem:[%s317 + $0x1a8] sm:$0xff] %v2334
        %2539 = vst [vmem:[%s317 + $0x1b0] sm:$0xff] %v2349
        %2540 = vst [vmem:[%s317 + $0x1b8] sm:$0xff] %v2364
        %2541 = vst [vmem:[%s317 + $0x1c0] sm:$0xff] %v2379
        %2542 = vst [vmem:[%s317 + $0x1c8] sm:$0xff] %v2394
        %2543 = vst [vmem:[%s317 + $0x1d0] sm:$0xff] %v2409
        %2544 = vst [vmem:[%s317 + $0x1d8] sm:$0xff] %v2424
        %2545 = vst [vmem:[%s317 + $0x1e0] sm:$0xff] %v2439
        %2546 = vst [vmem:[%s317 + $0x1e8] sm:$0xff] %v2454
        %2547 = vst [vmem:[%s317 + $0x1f0] sm:$0xff] %v2469
        %2548 = vst [vmem:[%s317 + $0x1f8] sm:$0xff] %v2484
        %s2549 = sand.u32 %s142, 1
        %s2550 = scalar_lea.sflag [#allocation4], %s2549
        %s2551 = sand.u32 %s142, 1
        %s2552 = smul.addr %s2551, 512
        %s2553 = scalar_lea.vmem [#allocation11], %s2552
        // Predicated region
        $region61: #{tpu_custom_call.1} parent=39 // pred_check
          %p2554 = pneg %p152
        $region62: #{tpu_custom_call.1} parent=39 // pred_check_branch
          %2556 = sbr.rel (%p2554) target = $region64
        $region63: #{tpu_custom_call.1} parent=39 // pred_region
          %s2557 = smul.u32 32, %s24
          %s2558 = ssub.s32 63, %s2557
          %p2559 = scmp.lt.s32.totalorder %s2558, 32
          %s2560 = scalar_select %p2559, %s2558, 32
          %s2561 = smul.u32 8, %s2560
          %s2562 = smul.u32 %s2561, 2
          %s2563 = ssub.s32 512, %s2562
          %s2564 = sshll.u32 %s2563, 4
          %2565 = vsyncadd %s2550, %s2564
          %p2566 = scmp.ne.s32.totalorder 0, %s2562
          %s2567 = smul.addr %s2557, 2
          %s2568 = smul.addr %s2567, 8
          %s2569 = scalar_lea.hbm %s5, %s2568
          %s2570 = smul.u32 16, %s2560
          %s2571 = sshll.u32 %s2553, 4
          %s2572 = int_to_ptr.vmem [resolvable:$true] %s2571
          %s2573 = sshll.u32 %s2569, 4
          %s2574 = int_to_ptr.hbm [resolvable:$true] %s2573
          %s2575 = sshll.u32 %s2570, 4
          %2579 = dma.vmem_to_hbm [thread:$0]  (%p2566), %s2572, %s2575, %s2574, %s2550, 256, 256, 16
        $region64: #{tpu_custom_call.1} parent=39 // pred_fallthru
          _
      $region40: #{tpu_custom_call.1} parent=5 // pred_fallthru
        _
      %p2580 = scmp.le.s32.totalorder 2, %s19
      // Predicated region
      $region65: #{tpu_custom_call.1} parent=5 // pred_check
        %p2581 = pneg %p2580
      $region66: #{tpu_custom_call.1} parent=5 // pred_check_branch
        %2583 = sbr.rel (%p2581) target = $region68
      $region67: #{tpu_custom_call.1} parent=5 // pred_region
        %s2584 = ssub.s32 %s19, 2
        // Predicated region
        $region69: #{tpu_custom_call.1} parent=67 // pred_check
          %p2585 = pneg %p158
        $region70: #{tpu_custom_call.1} parent=67 // pred_check_branch
          %2587 = sbr.rel (%p2585) target = $region72
        $region71: #{tpu_custom_call.1} parent=67 // pred_region
          %s2588 = sand.u32 %s143, 1
          %s2589 = scalar_lea.sflag [#allocation4], %s2588
          %s2590 = sand.u32 %s143, 1
          %s2591 = smul.addr %s2590, 512
          %s2592 = scalar_lea.vmem [#allocation11], %s2591
          %2594 = dma.done %s2589, 8192
        $region72: #{tpu_custom_call.1} parent=67 // pred_fallthru
          _
      $region68: #{tpu_custom_call.1} parent=5 // pred_fallthru
        _
    $region6: #{tpu_custom_call.1} parent=1 // loop_footer
      %s23 = sadd.s32 1, %s19
    $region7: #{tpu_custom_call.1} parent=1 // loop_footer_branch
      %18 = sbr.rel target = $region3
    $region8: #{tpu_custom_call.1} parent=1 // loop_exit
      _
    %2595 = vsyncpa [#allocation3], 1
    %s2596 = scalar_lea.sflag [#allocation3], 1
    %2597 = vsyncpa %s2596, 1
    %2598 = vsyncpa [#allocation6], 1
    %2599 = vsyncpa [#allocation9], 1
    %2600 = vsyncpa [#allocation4], 1
    %s2601 = scalar_lea.sflag [#allocation4], 1
    %2602 = vsyncpa %s2601, 1

</llo_original>
